<compile_context>
chip_gen: v7x
topology: tpu7x:2x2x1
jax: 0.10.0
libtpu: 0.0.40
codegen_flags: <defaults>
</compile_context>

<pallas_src>
import jax
import jax.numpy as jnp
import numpy as np
from jax import lax
from jax.experimental import pallas as pl
from jax.experimental.pallas import tpu as pltpu

LN_EPS = 1e-5

# Row indices inside the packed (n_rows, VW) parameter-vector table.
(R_B1, R_LN1G, R_LN1B, R_CONVB, R_CLNG, R_CLNB, R_BIH, R_BHHN,
 R_GLNG, R_GLNB, R_B2, R_LN2G, R_LN2B, R_BD) = range(14)
_N_VEC_ROWS = 14


def _sigmoid(x):
    # sigmoid(x) == 0.5*tanh(0.5*x) + 0.5 : one EUP tanh, no f32 divide.
    return 0.5 * jnp.tanh(0.5 * x) + 0.5


def _silu(x):
    return x * _sigmoid(x)


def _layernorm(x, gamma, beta):
    mean = jnp.mean(x, axis=-1, keepdims=True)
    var = jnp.mean((x - mean) ** 2, axis=-1, keepdims=True)
    return (x - mean) * lax.rsqrt(var + LN_EPS) * gamma + beta


def mamba_kernel(
    # inputs
    x_ref, vec_ref, w12_ref, convw_ref, wih_ref, whh_ref, wd_ref,
    # outputs
    out_ref, hn_ref,
    # scratch
    gru_scr,
):
    TB, D = x_ref.shape                 # T*B_pad rows, time-major flattened
    H = whh_ref.shape[0]
    Bp = hn_ref.shape[0]                # padded batch (multiple of 8)
    T = TB // Bp                        # static

    x = x_ref[...]                      # (TB, D) f32
    vecs = vec_ref[...]                 # packed tiny vectors, one DMA

    def vrow(r, n):                     # (1, n) static slice of the table
        return vecs[r:r + 1, :n]

    # ---- strand1 / strand2 projections fused: one (TB,D)@(D,2H) matmul ------
    s12 = jnp.dot(x, w12_ref[...], preferred_element_type=jnp.float32)
    s1 = _layernorm(s12[:, :H] + vrow(R_B1, H), vrow(R_LN1G, H), vrow(R_LN1B, H))
    strand2 = _silu(_layernorm(s12[:, H:] + vrow(R_B2, H),
                               vrow(R_LN2G, H), vrow(R_LN2B, H)))

    # ---- Conv1d (k=3, padding=1) along time: ONE matmul against packed taps --
    # Time-major layout: t-1 / t+1 of the same batch element are exactly Bp rows
    # away, so the taps are aligned full-sublane-granule row shifts (Bp = 8).
    c = jnp.dot(s1, convw_ref[...], preferred_element_type=jnp.float32)   # (TB, 3H)
    zblk = jnp.zeros((Bp, H), jnp.float32)
    c_prev = jnp.concatenate([zblk, c[:-Bp, :H]], axis=0)       # tap @ t-1
    c_next = jnp.concatenate([c[Bp:, 2 * H:], zblk], axis=0)    # tap @ t+1
    conv = c[:, H:2 * H] + c_prev + c_next + vrow(R_CONVB, H)
    conv = _silu(_layernorm(conv, vrow(R_CLNG, H), vrow(R_CLNB, H)))

    # ---- fused input-side gate pre-activations: one (TB,H)@(H,3H) matmul -----
    # vec row R_BIH already has b_hr / b_hz folded in; b_hn stays in the r* term.
    gx = jnp.dot(conv, wih_ref[...], preferred_element_type=jnp.float32) \
        + vrow(R_BIH, 3 * H)
    whh = whh_ref[...]                  # (H, 3H) packed [r | z | n]
    bhh_n = vrow(R_BHHN, H)             # (1, H)

    # ---- batched nn.GRU recurrence, fully unrolled (T static & small) --------
    # TODO(synk): at production T use lax.fori_loop(..., unroll=4..8) instead of
    # a full Python unroll (bounds vreg live ranges, keeps LLO visibility).
    h = jnp.zeros((Bp, H), jnp.float32)
    for t in range(T):
        gh = jnp.dot(h, whh, preferred_element_type=jnp.float32)    # (Bp, 3H)
        gx_t = gx[t * Bp:(t + 1) * Bp, :]                           # aligned slice
        rz = _sigmoid(gx_t[:, :2 * H] + gh[:, :2 * H])              # r,z in one pass
        r = rz[:, :H]
        z = rz[:, H:]
        n = jnp.tanh(gx_t[:, 2 * H:] + r * (gh[:, 2 * H:] + bhh_n))
        h = (1.0 - z) * n + z * h
        gru_scr[t * Bp:(t + 1) * Bp, :] = h                         # aligned store
    hn_ref[...] = h

    strand1 = _layernorm(gru_scr[...], vrow(R_GLNG, H), vrow(R_GLNB, H))

    # ---- gate, down-projection, residual --------------------------------------
    y = jnp.dot(strand1 * strand2, wd_ref[...],
                preferred_element_type=jnp.float32) + vrow(R_BD, D)
    out_ref[...] = (y + x).astype(out_ref.dtype)


def mamba_forward(x, params):
    B, T, D = x.shape
    H = params["w1"].shape[1]
    Bp = ((B + 7) // 8) * 8             # pad batch to the sublane granule
    TBp = T * Bp

    # Time-major flatten (row t*Bp + b == x[b, t]); padded rows are zeros and are
    # sliced off below (they never influence real rows).
    x_pad = jnp.pad(x.astype(jnp.float32), ((0, Bp - B), (0, 0), (0, 0)))
    x_flat = jnp.transpose(x_pad, (1, 0, 2)).reshape(TBp, D)

    # ---- pack weights ---------------------------------------------------------
    w12 = jnp.concatenate([params["w1"], params["w2"]], axis=1)                # (D, 2H)
    convw_p = jnp.concatenate([params["convw"][k] for k in range(3)], axis=1)  # (H, 3H)
    wih_p = jnp.concatenate([params["wih"][k] for k in range(3)], axis=1)      # (H, 3H)
    whh_p = jnp.concatenate([params["whh"][k] for k in range(3)], axis=1)      # (H, 3H)
    bih_fold = jnp.concatenate([params["bih"][0] + params["bhh"][0],
                                params["bih"][1] + params["bhh"][1],
                                params["bih"][2]], axis=1)                     # (1, 3H)

    # ---- pack all tiny (1,n) vectors into ONE table (one prologue DMA) --------
    VW = max(128, ((max(3 * H, D) + 127) // 128) * 128)
    rows = [None] * _N_VEC_ROWS
    rows[R_B1], rows[R_LN1G], rows[R_LN1B] = params["b1"], params["ln1_g"], params["ln1_b"]
    rows[R_CONVB], rows[R_CLNG], rows[R_CLNB] = params["convb"], params["clng"], params["clnb"]
    rows[R_BIH], rows[R_BHHN] = bih_fold, params["bhh"][2]
    rows[R_GLNG], rows[R_GLNB] = params["glng"], params["glnb"]
    rows[R_B2], rows[R_LN2G], rows[R_LN2B] = params["b2"], params["ln2_g"], params["ln2_b"]
    rows[R_BD] = params["bd"]
    vec_tbl = jnp.concatenate(
        [jnp.pad(r.astype(jnp.float32), ((0, 0), (0, VW - r.shape[1]))) for r in rows],
        axis=0)
    n_rows = ((_N_VEC_ROWS + 7) // 8) * 8
    vec_tbl = jnp.pad(vec_tbl, ((0, n_rows - _N_VEC_ROWS), (0, 0)))

    def full(*shape):
        return pl.BlockSpec(shape, lambda i, s=len(shape): (0,) * s)

    out_flat, hn = pl.pallas_call(
        mamba_kernel,
        out_shape=(
            jax.ShapeDtypeStruct((TBp, D), jnp.float32),
            jax.ShapeDtypeStruct((Bp, H), jnp.float32),
        ),
        grid_spec=pltpu.PrefetchScalarGridSpec(
            num_scalar_prefetch=0,
            grid=(1,),
            in_specs=[
                full(TBp, D),            # x (time-major, batch-padded)
                full(n_rows, VW),        # packed bias / LayerNorm vector table
                full(D, 2 * H),          # [w1 | w2]
                full(H, 3 * H),          # conv taps [w0 | w1 | w2]
                full(H, 3 * H),          # GRU W_ih packed [r | z | n]
                full(H, 3 * H),          # GRU W_hh packed [r | z | n]
                full(H, D),              # down projection
            ],
            out_specs=(full(TBp, D), full(Bp, H)),
            scratch_shapes=[pltpu.VMEM((TBp, H), jnp.float32)],
        ),
        compiler_params=pltpu.CompilerParams(dimension_semantics=("arbitrary",)),
    )(x_flat, vec_tbl, w12, convw_p, wih_p, whh_p, params["wd"])

    out = out_flat.reshape(T, Bp, D)[:, :B, :].transpose(1, 0, 2)   # (B, T, D)
    return out, hn[:B][None, :, :]                                  # torch h_n: (1, B, H)


# ---------------- pure-JAX reference (for verification only) -----------------
def mamba_reference(x, params):
    def ln(v, g, b):
        m = jnp.mean(v, -1, keepdims=True)
        var = jnp.mean((v - m) ** 2, -1, keepdims=True)
        return (v - m) / jnp.sqrt(var + LN_EPS) * g + b

    silu = lambda v: v * jax.nn.sigmoid(v)
    B, T, D = x.shape
    H = params["w1"].shape[1]

    s1 = ln(x @ params["w1"] + params["b1"], params["ln1_g"], params["ln1_b"])
    zr = jnp.zeros((B, 1, H))
    prev = jnp.concatenate([zr, s1[:, :-1]], axis=1)
    nxt = jnp.concatenate([s1[:, 1:], zr], axis=1)
    conv = (prev @ params["convw"][0] + s1 @ params["convw"][1]
            + nxt @ params["convw"][2] + params["convb"])
    conv = silu(ln(conv, params["clng"], params["clnb"]))

    gx = [conv @ params["wih"][i] + params["bih"][i] for i in range(3)]

    def step(h, t):
        gh = [h @ params["whh"][i] + params["bhh"][i][0] for i in range(3)]
        r = jax.nn.sigmoid(gx[0][:, t] + gh[0])
        z = jax.nn.sigmoid(gx[1][:, t] + gh[1])
        n = jnp.tanh(gx[2][:, t] + r * gh[2])
        h = (1 - z) * n + z * h
        return h, h

    h_fin, hs = lax.scan(step, jnp.zeros((B, H)), jnp.arange(T))
    gru = jnp.transpose(hs, (1, 0, 2))
    strand1 = ln(gru, params["glng"], params["glnb"])
    strand2 = silu(ln(x @ params["w2"] + params["b2"], params["ln2_g"], params["ln2_b"]))
    out = (strand1 * strand2) @ params["wd"] + params["bd"] + x
    return out, h_fin[None, :, :]


def make_params(key, D, H):
    ks = jax.random.split(key, 8)
    xav = lambda k, fin, fout: jax.random.normal(k, (fin, fout), jnp.float32) * np.sqrt(2.0 / (fin + fout))
    p = {}
    p["w1"] = xav(ks[0], D, H)
    p["b1"] = jnp.zeros((1, H), jnp.float32)
    p["ln1_g"] = jnp.ones((1, H), jnp.float32)
    p["ln1_b"] = jnp.zeros((1, H), jnp.float32)
    # conv1d weight (torch layout (H_out, H_in, 3)) -> (3, H_in, H_out)
    conv_t = jax.random.normal(ks[1], (H, H, 3), jnp.float32) * np.sqrt(2.0 / (H * 3))
    p["convw"] = jnp.transpose(conv_t, (2, 1, 0))
    p["convb"] = jnp.zeros((1, H), jnp.float32)
    p["clng"] = jnp.ones((1, H), jnp.float32)
    p["clnb"] = jnp.zeros((1, H), jnp.float32)
    # nn.GRU weights (torch layout (3H, H) ordered [r, z, n]) -> (3, H_in, H_out)
    s = 1.0 / np.sqrt(H)
    w_ih = jax.random.uniform(ks[2], (3 * H, H), jnp.float32, -s, s)
    w_hh = jax.random.uniform(ks[3], (3 * H, H), jnp.float32, -s, s)
    b_ih = jax.random.uniform(ks[4], (3 * H,), jnp.float32, -s, s)
    b_hh = jax.random.uniform(ks[5], (3 * H,), jnp.float32, -s, s)
    p["wih"] = jnp.stack([w_ih[i * H:(i + 1) * H].T for i in range(3)])
    p["whh"] = jnp.stack([w_hh[i * H:(i + 1) * H].T for i in range(3)])
    p["bih"] = jnp.stack([b_ih[i * H:(i + 1) * H][None, :] for i in range(3)])
    p["bhh"] = jnp.stack([b_hh[i * H:(i + 1) * H][None, :] for i in range(3)])
    p["glng"] = jnp.ones((1, H), jnp.float32)
    p["glnb"] = jnp.zeros((1, H), jnp.float32)
    p["w2"] = xav(ks[6], D, H)
    p["b2"] = jnp.zeros((1, H), jnp.float32)
    p["ln2_g"] = jnp.ones((1, H), jnp.float32)
    p["ln2_b"] = jnp.zeros((1, H), jnp.float32)
    p["wd"] = xav(ks[7], H, D)
    p["bd"] = jnp.zeros((1, D), jnp.float32)
    return p


if __name__ == "__main__":
    B, T, D, H = 2, 8, 16, 32
    key = jax.random.PRNGKey(0)
    kx, kp = jax.random.split(key)
    x = jax.random.normal(kx, (B, T, D), jnp.float32)
    params = make_params(kp, D, H)

    out, h_n = mamba_forward(x, params)
    out = jax.block_until_ready(out)
    h_n = jax.block_until_ready(h_n)

    ref_out, ref_hn = mamba_reference(x, params)
    np.testing.assert_allclose(np.asarray(out), np.asarray(ref_out), rtol=1e-4, atol=1e-4)
    np.testing.assert_allclose(np.asarray(h_n), np.asarray(ref_hn), rtol=1e-4, atol=1e-4)

    assert out.shape == (B, T, D) and h_n.shape == (1, B, H)
    print("KERNEL_OK")
</pallas_src>

<mosaic_0001>
module attributes {stable_mosaic.version = 11 : i64} {
  func.func @mamba_kernel(%arg0: i32, %arg1: memref<64x16xf32, #tpu.memory_space<vmem>>, %arg2: memref<16x128xf32, #tpu.memory_space<vmem>>, %arg3: memref<16x64xf32, #tpu.memory_space<vmem>>, %arg4: memref<32x96xf32, #tpu.memory_space<vmem>>, %arg5: memref<32x96xf32, #tpu.memory_space<vmem>>, %arg6: memref<32x96xf32, #tpu.memory_space<vmem>>, %arg7: memref<32x16xf32, #tpu.memory_space<vmem>>, %arg8: memref<64x16xf32, #tpu.memory_space<vmem>>, %arg9: memref<8x32xf32, #tpu.memory_space<vmem>>, %arg10: memref<64x32xf32, #tpu.memory_space<vmem>>) attributes {dimension_semantics = [#tpu.dimension_semantics<arbitrary>], iteration_bounds = array<i64: 1>, scalar_prefetch = 0 : i64, scratch_operands = 1 : i64, tpu.core_type = #tpu.core_type<tc>, window_params = [{pipeline_mode = #tpu.pipeline_mode<synchronous>, transform_indices = @transform_0, window_bounds = array<i64: 64, 16>}, {pipeline_mode = #tpu.pipeline_mode<synchronous>, transform_indices = @transform_1, window_bounds = array<i64: 16, 128>}, {pipeline_mode = #tpu.pipeline_mode<synchronous>, transform_indices = @transform_2, window_bounds = array<i64: 16, 64>}, {pipeline_mode = #tpu.pipeline_mode<synchronous>, transform_indices = @transform_3, window_bounds = array<i64: 32, 96>}, {pipeline_mode = #tpu.pipeline_mode<synchronous>, transform_indices = @transform_4, window_bounds = array<i64: 32, 96>}, {pipeline_mode = #tpu.pipeline_mode<synchronous>, transform_indices = @transform_5, window_bounds = array<i64: 32, 96>}, {pipeline_mode = #tpu.pipeline_mode<synchronous>, transform_indices = @transform_6, window_bounds = array<i64: 32, 16>}, {pipeline_mode = #tpu.pipeline_mode<synchronous>, transform_indices = @transform_7, window_bounds = array<i64: 64, 16>}, {pipeline_mode = #tpu.pipeline_mode<synchronous>, transform_indices = @transform_8, window_bounds = array<i64: 8, 32>}]} {
    %c0 = arith.constant 0 : index
    %c0_0 = arith.constant 0 : index
    %0 = vector.load %arg1[%c0, %c0_0] : memref<64x16xf32, #tpu.memory_space<vmem>>, vector<64x16xf32>
    %c0_1 = arith.constant 0 : index
    %c0_2 = arith.constant 0 : index
    %1 = vector.load %arg2[%c0_1, %c0_2] : memref<16x128xf32, #tpu.memory_space<vmem>>, vector<16x128xf32>
    %c0_3 = arith.constant 0 : index
    %c0_4 = arith.constant 0 : index
    %2 = vector.load %arg3[%c0_3, %c0_4] : memref<16x64xf32, #tpu.memory_space<vmem>>, vector<16x64xf32>
    %cst = arith.constant dense<0.000000e+00> : vector<64x64xf32>
    %3 = tpu.matmul %0, %2, %cst {dimension_numbers = #tpu.dot_dimension_numbers<[1], [0], [0], [1], [0, 0, 1, 1], [], []>} : vector<64x16xf32>, vector<16x64xf32>, vector<64x64xf32> -> vector<64x64xf32>
    %4 = vector.extract_strided_slice %3 {offsets = [0, 0], sizes = [64, 32], strides = [1, 1]} : vector<64x64xf32> to vector<64x32xf32>
    %5 = vector.extract_strided_slice %1 {offsets = [0, 0], sizes = [1, 32], strides = [1, 1]} : vector<16x128xf32> to vector<1x32xf32>
    %6 = vector.broadcast %5 : vector<1x32xf32> to vector<64x32xf32>
    %7 = arith.addf %4, %6 : vector<64x32xf32>
    %8 = vector.extract_strided_slice %1 {offsets = [1, 0], sizes = [1, 32], strides = [1, 1]} : vector<16x128xf32> to vector<1x32xf32>
    %9 = vector.extract_strided_slice %1 {offsets = [2, 0], sizes = [1, 32], strides = [1, 1]} : vector<16x128xf32> to vector<1x32xf32>
    %cst_5 = arith.constant dense<0.000000e+00> : vector<64xf32>
    %10 = vector.multi_reduction <add>, %7, %cst_5 [1] : vector<64x32xf32> to vector<64xf32>
    %11 = vector.shape_cast %10 : vector<64xf32> to vector<64x1xf32>
    %cst_6 = arith.constant 3.200000e+01 : f32
    %12 = vector.broadcast %cst_6 : f32 to vector<64x1xf32>
    %13 = arith.divf %11, %12 : vector<64x1xf32>
    %14 = vector.broadcast %13 : vector<64x1xf32> to vector<64x32xf32>
    %15 = arith.subf %7, %14 : vector<64x32xf32>
    %16 = arith.mulf %15, %15 : vector<64x32xf32>
    %cst_7 = arith.constant dense<0.000000e+00> : vector<64xf32>
    %17 = vector.multi_reduction <add>, %16, %cst_7 [1] : vector<64x32xf32> to vector<64xf32>
    %18 = vector.shape_cast %17 : vector<64xf32> to vector<64x1xf32>
    %cst_8 = arith.constant 3.200000e+01 : f32
    %19 = vector.broadcast %cst_8 : f32 to vector<64x1xf32>
    %20 = arith.divf %18, %19 : vector<64x1xf32>
    %21 = vector.broadcast %13 : vector<64x1xf32> to vector<64x32xf32>
    %22 = arith.subf %7, %21 : vector<64x32xf32>
    %cst_9 = arith.constant 9.99999974E-6 : f32
    %23 = vector.broadcast %cst_9 : f32 to vector<64x1xf32>
    %24 = arith.addf %20, %23 : vector<64x1xf32>
    %25 = math.rsqrt %24 : vector<64x1xf32>
    %26 = vector.broadcast %25 : vector<64x1xf32> to vector<64x32xf32>
    %27 = arith.mulf %22, %26 : vector<64x32xf32>
    %28 = vector.broadcast %8 : vector<1x32xf32> to vector<64x32xf32>
    %29 = arith.mulf %27, %28 : vector<64x32xf32>
    %30 = vector.broadcast %9 : vector<1x32xf32> to vector<64x32xf32>
    %31 = arith.addf %29, %30 : vector<64x32xf32>
    %32 = vector.extract_strided_slice %3 {offsets = [0, 32], sizes = [64, 32], strides = [1, 1]} : vector<64x64xf32> to vector<64x32xf32>
    %33 = vector.extract_strided_slice %1 {offsets = [10, 0], sizes = [1, 32], strides = [1, 1]} : vector<16x128xf32> to vector<1x32xf32>
    %34 = vector.broadcast %33 : vector<1x32xf32> to vector<64x32xf32>
    %35 = arith.addf %32, %34 : vector<64x32xf32>
    %36 = vector.extract_strided_slice %1 {offsets = [11, 0], sizes = [1, 32], strides = [1, 1]} : vector<16x128xf32> to vector<1x32xf32>
    %37 = vector.extract_strided_slice %1 {offsets = [12, 0], sizes = [1, 32], strides = [1, 1]} : vector<16x128xf32> to vector<1x32xf32>
    %cst_10 = arith.constant dense<0.000000e+00> : vector<64xf32>
    %38 = vector.multi_reduction <add>, %35, %cst_10 [1] : vector<64x32xf32> to vector<64xf32>
    %39 = vector.shape_cast %38 : vector<64xf32> to vector<64x1xf32>
    %cst_11 = arith.constant 3.200000e+01 : f32
    %40 = vector.broadcast %cst_11 : f32 to vector<64x1xf32>
    %41 = arith.divf %39, %40 : vector<64x1xf32>
    %42 = vector.broadcast %41 : vector<64x1xf32> to vector<64x32xf32>
    %43 = arith.subf %35, %42 : vector<64x32xf32>
    %44 = arith.mulf %43, %43 : vector<64x32xf32>
    %cst_12 = arith.constant dense<0.000000e+00> : vector<64xf32>
    %45 = vector.multi_reduction <add>, %44, %cst_12 [1] : vector<64x32xf32> to vector<64xf32>
    %46 = vector.shape_cast %45 : vector<64xf32> to vector<64x1xf32>
    %cst_13 = arith.constant 3.200000e+01 : f32
    %47 = vector.broadcast %cst_13 : f32 to vector<64x1xf32>
    %48 = arith.divf %46, %47 : vector<64x1xf32>
    %49 = vector.broadcast %41 : vector<64x1xf32> to vector<64x32xf32>
    %50 = arith.subf %35, %49 : vector<64x32xf32>
    %cst_14 = arith.constant 9.99999974E-6 : f32
    %51 = vector.broadcast %cst_14 : f32 to vector<64x1xf32>
    %52 = arith.addf %48, %51 : vector<64x1xf32>
    %53 = math.rsqrt %52 : vector<64x1xf32>
    %54 = vector.broadcast %53 : vector<64x1xf32> to vector<64x32xf32>
    %55 = arith.mulf %50, %54 : vector<64x32xf32>
    %56 = vector.broadcast %36 : vector<1x32xf32> to vector<64x32xf32>
    %57 = arith.mulf %55, %56 : vector<64x32xf32>
    %58 = vector.broadcast %37 : vector<1x32xf32> to vector<64x32xf32>
    %59 = arith.addf %57, %58 : vector<64x32xf32>
    %cst_15 = arith.constant 5.000000e-01 : f32
    %60 = vector.broadcast %cst_15 : f32 to vector<64x32xf32>
    %61 = arith.mulf %60, %59 : vector<64x32xf32>
    %62 = math.tanh %61 : vector<64x32xf32>
    %cst_16 = arith.constant 5.000000e-01 : f32
    %63 = vector.broadcast %cst_16 : f32 to vector<64x32xf32>
    %64 = arith.mulf %63, %62 : vector<64x32xf32>
    %cst_17 = arith.constant 5.000000e-01 : f32
    %65 = vector.broadcast %cst_17 : f32 to vector<64x32xf32>
    %66 = arith.addf %64, %65 : vector<64x32xf32>
    %67 = arith.mulf %59, %66 : vector<64x32xf32>
    %c0_18 = arith.constant 0 : index
    %c0_19 = arith.constant 0 : index
    %68 = vector.load %arg4[%c0_18, %c0_19] : memref<32x96xf32, #tpu.memory_space<vmem>>, vector<32x96xf32>
    %cst_20 = arith.constant dense<0.000000e+00> : vector<64x96xf32>
    %69 = tpu.matmul %31, %68, %cst_20 {dimension_numbers = #tpu.dot_dimension_numbers<[1], [0], [0], [1], [0, 0, 1, 1], [], []>} : vector<64x32xf32>, vector<32x96xf32>, vector<64x96xf32> -> vector<64x96xf32>
    %cst_21 = arith.constant 0.000000e+00 : f32
    %70 = vector.broadcast %cst_21 : f32 to vector<8x32xf32>
    %71 = vector.extract_strided_slice %69 {offsets = [0, 0], sizes = [56, 32], strides = [1, 1]} : vector<64x96xf32> to vector<56x32xf32>
    %72 = tpu.concatenate %70, %71 in 0 : vector<8x32xf32>, vector<56x32xf32> -> vector<64x32xf32>
    %73 = vector.extract_strided_slice %69 {offsets = [8, 64], sizes = [56, 32], strides = [1, 1]} : vector<64x96xf32> to vector<56x32xf32>
    %74 = tpu.concatenate %73, %70 in 0 : vector<56x32xf32>, vector<8x32xf32> -> vector<64x32xf32>
    %75 = vector.extract_strided_slice %69 {offsets = [0, 32], sizes = [64, 32], strides = [1, 1]} : vector<64x96xf32> to vector<64x32xf32>
    %76 = arith.addf %75, %72 : vector<64x32xf32>
    %77 = arith.addf %76, %74 : vector<64x32xf32>
    %78 = vector.extract_strided_slice %1 {offsets = [3, 0], sizes = [1, 32], strides = [1, 1]} : vector<16x128xf32> to vector<1x32xf32>
    %79 = vector.broadcast %78 : vector<1x32xf32> to vector<64x32xf32>
    %80 = arith.addf %77, %79 : vector<64x32xf32>
    %81 = vector.extract_strided_slice %1 {offsets = [4, 0], sizes = [1, 32], strides = [1, 1]} : vector<16x128xf32> to vector<1x32xf32>
    %82 = vector.extract_strided_slice %1 {offsets = [5, 0], sizes = [1, 32], strides = [1, 1]} : vector<16x128xf32> to vector<1x32xf32>
    %cst_22 = arith.constant dense<0.000000e+00> : vector<64xf32>
    %83 = vector.multi_reduction <add>, %80, %cst_22 [1] : vector<64x32xf32> to vector<64xf32>
    %84 = vector.shape_cast %83 : vector<64xf32> to vector<64x1xf32>
    %cst_23 = arith.constant 3.200000e+01 : f32
    %85 = vector.broadcast %cst_23 : f32 to vector<64x1xf32>
    %86 = arith.divf %84, %85 : vector<64x1xf32>
    %87 = vector.broadcast %86 : vector<64x1xf32> to vector<64x32xf32>
    %88 = arith.subf %80, %87 : vector<64x32xf32>
    %89 = arith.mulf %88, %88 : vector<64x32xf32>
    %cst_24 = arith.constant dense<0.000000e+00> : vector<64xf32>
    %90 = vector.multi_reduction <add>, %89, %cst_24 [1] : vector<64x32xf32> to vector<64xf32>
    %91 = vector.shape_cast %90 : vector<64xf32> to vector<64x1xf32>
    %cst_25 = arith.constant 3.200000e+01 : f32
    %92 = vector.broadcast %cst_25 : f32 to vector<64x1xf32>
    %93 = arith.divf %91, %92 : vector<64x1xf32>
    %94 = vector.broadcast %86 : vector<64x1xf32> to vector<64x32xf32>
    %95 = arith.subf %80, %94 : vector<64x32xf32>
    %cst_26 = arith.constant 9.99999974E-6 : f32
    %96 = vector.broadcast %cst_26 : f32 to vector<64x1xf32>
    %97 = arith.addf %93, %96 : vector<64x1xf32>
    %98 = math.rsqrt %97 : vector<64x1xf32>
    %99 = vector.broadcast %98 : vector<64x1xf32> to vector<64x32xf32>
    %100 = arith.mulf %95, %99 : vector<64x32xf32>
    %101 = vector.broadcast %81 : vector<1x32xf32> to vector<64x32xf32>
    %102 = arith.mulf %100, %101 : vector<64x32xf32>
    %103 = vector.broadcast %82 : vector<1x32xf32> to vector<64x32xf32>
    %104 = arith.addf %102, %103 : vector<64x32xf32>
    %cst_27 = arith.constant 5.000000e-01 : f32
    %105 = vector.broadcast %cst_27 : f32 to vector<64x32xf32>
    %106 = arith.mulf %105, %104 : vector<64x32xf32>
    %107 = math.tanh %106 : vector<64x32xf32>
    %cst_28 = arith.constant 5.000000e-01 : f32
    %108 = vector.broadcast %cst_28 : f32 to vector<64x32xf32>
    %109 = arith.mulf %108, %107 : vector<64x32xf32>
    %cst_29 = arith.constant 5.000000e-01 : f32
    %110 = vector.broadcast %cst_29 : f32 to vector<64x32xf32>
    %111 = arith.addf %109, %110 : vector<64x32xf32>
    %112 = arith.mulf %104, %111 : vector<64x32xf32>
    %c0_30 = arith.constant 0 : index
    %c0_31 = arith.constant 0 : index
    %113 = vector.load %arg5[%c0_30, %c0_31] : memref<32x96xf32, #tpu.memory_space<vmem>>, vector<32x96xf32>
    %cst_32 = arith.constant dense<0.000000e+00> : vector<64x96xf32>
    %114 = tpu.matmul %112, %113, %cst_32 {dimension_numbers = #tpu.dot_dimension_numbers<[1], [0], [0], [1], [0, 0, 1, 1], [], []>} : vector<64x32xf32>, vector<32x96xf32>, vector<64x96xf32> -> vector<64x96xf32>
    %115 = vector.extract_strided_slice %1 {offsets = [6, 0], sizes = [1, 96], strides = [1, 1]} : vector<16x128xf32> to vector<1x96xf32>
    %116 = vector.broadcast %115 : vector<1x96xf32> to vector<64x96xf32>
    %117 = arith.addf %114, %116 : vector<64x96xf32>
    %c0_33 = arith.constant 0 : index
    %c0_34 = arith.constant 0 : index
    %118 = vector.load %arg6[%c0_33, %c0_34] : memref<32x96xf32, #tpu.memory_space<vmem>>, vector<32x96xf32>
    %119 = vector.extract_strided_slice %1 {offsets = [7, 0], sizes = [1, 32], strides = [1, 1]} : vector<16x128xf32> to vector<1x32xf32>
    %cst_35 = arith.constant 0.000000e+00 : f32
    %120 = vector.broadcast %cst_35 : f32 to vector<8x32xf32>
    %cst_36 = arith.constant dense<0.000000e+00> : vector<8x96xf32>
    %121 = tpu.matmul %120, %118, %cst_36 {dimension_numbers = #tpu.dot_dimension_numbers<[1], [0], [0], [1], [0, 0, 1, 1], [], []>} : vector<8x32xf32>, vector<32x96xf32>, vector<8x96xf32> -> vector<8x96xf32>
    %122 = vector.extract_strided_slice %117 {offsets = [0, 0], sizes = [8, 96], strides = [1, 1]} : vector<64x96xf32> to vector<8x96xf32>
    %123 = vector.extract_strided_slice %122 {offsets = [0, 0], sizes = [8, 64], strides = [1, 1]} : vector<8x96xf32> to vector<8x64xf32>
    %124 = vector.extract_strided_slice %121 {offsets = [0, 0], sizes = [8, 64], strides = [1, 1]} : vector<8x96xf32> to vector<8x64xf32>
    %125 = arith.addf %123, %124 : vector<8x64xf32>
    %cst_37 = arith.constant 5.000000e-01 : f32
    %126 = vector.broadcast %cst_37 : f32 to vector<8x64xf32>
    %127 = arith.mulf %126, %125 : vector<8x64xf32>
    %128 = math.tanh %127 : vector<8x64xf32>
    %cst_38 = arith.constant 5.000000e-01 : f32
    %129 = vector.broadcast %cst_38 : f32 to vector<8x64xf32>
    %130 = arith.mulf %129, %128 : vector<8x64xf32>
    %cst_39 = arith.constant 5.000000e-01 : f32
    %131 = vector.broadcast %cst_39 : f32 to vector<8x64xf32>
    %132 = arith.addf %130, %131 : vector<8x64xf32>
    %133 = vector.extract_strided_slice %132 {offsets = [0, 0], sizes = [8, 32], strides = [1, 1]} : vector<8x64xf32> to vector<8x32xf32>
    %134 = vector.extract_strided_slice %132 {offsets = [0, 32], sizes = [8, 32], strides = [1, 1]} : vector<8x64xf32> to vector<8x32xf32>
    %135 = vector.extract_strided_slice %122 {offsets = [0, 64], sizes = [8, 32], strides = [1, 1]} : vector<8x96xf32> to vector<8x32xf32>
    %136 = vector.extract_strided_slice %121 {offsets = [0, 64], sizes = [8, 32], strides = [1, 1]} : vector<8x96xf32> to vector<8x32xf32>
    %137 = vector.broadcast %119 : vector<1x32xf32> to vector<8x32xf32>
    %138 = arith.addf %136, %137 : vector<8x32xf32>
    %139 = arith.mulf %133, %138 : vector<8x32xf32>
    %140 = arith.addf %135, %139 : vector<8x32xf32>
    %141 = math.tanh %140 : vector<8x32xf32>
    %cst_40 = arith.constant 1.000000e+00 : f32
    %142 = vector.broadcast %cst_40 : f32 to vector<8x32xf32>
    %143 = arith.subf %142, %134 : vector<8x32xf32>
    %144 = arith.mulf %143, %141 : vector<8x32xf32>
    %145 = arith.mulf %134, %120 : vector<8x32xf32>
    %146 = arith.addf %144, %145 : vector<8x32xf32>
    %c0_41 = arith.constant 0 : index
    %c0_42 = arith.constant 0 : index
    %147 = vector.load %arg10[%c0_41, %c0_42] : memref<64x32xf32, #tpu.memory_space<vmem>>, vector<8x32xf32>
    tpu.vector_store %arg10[%c0_41, %c0_42], %146 {strides = array<i32>} : memref<64x32xf32, #tpu.memory_space<vmem>>, vector<8x32xf32>,
    %cst_43 = arith.constant dense<0.000000e+00> : vector<8x96xf32>
    %148 = tpu.matmul %146, %118, %cst_43 {dimension_numbers = #tpu.dot_dimension_numbers<[1], [0], [0], [1], [0, 0, 1, 1], [], []>} : vector<8x32xf32>, vector<32x96xf32>, vector<8x96xf32> -> vector<8x96xf32>
    %149 = vector.extract_strided_slice %117 {offsets = [8, 0], sizes = [8, 96], strides = [1, 1]} : vector<64x96xf32> to vector<8x96xf32>
    %150 = vector.extract_strided_slice %149 {offsets = [0, 0], sizes = [8, 64], strides = [1, 1]} : vector<8x96xf32> to vector<8x64xf32>
    %151 = vector.extract_strided_slice %148 {offsets = [0, 0], sizes = [8, 64], strides = [1, 1]} : vector<8x96xf32> to vector<8x64xf32>
    %152 = arith.addf %150, %151 : vector<8x64xf32>
    %cst_44 = arith.constant 5.000000e-01 : f32
    %153 = vector.broadcast %cst_44 : f32 to vector<8x64xf32>
    %154 = arith.mulf %153, %152 : vector<8x64xf32>
    %155 = math.tanh %154 : vector<8x64xf32>
    %cst_45 = arith.constant 5.000000e-01 : f32
    %156 = vector.broadcast %cst_45 : f32 to vector<8x64xf32>
    %157 = arith.mulf %156, %155 : vector<8x64xf32>
    %cst_46 = arith.constant 5.000000e-01 : f32
    %158 = vector.broadcast %cst_46 : f32 to vector<8x64xf32>
    %159 = arith.addf %157, %158 : vector<8x64xf32>
    %160 = vector.extract_strided_slice %159 {offsets = [0, 0], sizes = [8, 32], strides = [1, 1]} : vector<8x64xf32> to vector<8x32xf32>
    %161 = vector.extract_strided_slice %159 {offsets = [0, 32], sizes = [8, 32], strides = [1, 1]} : vector<8x64xf32> to vector<8x32xf32>
    %162 = vector.extract_strided_slice %149 {offsets = [0, 64], sizes = [8, 32], strides = [1, 1]} : vector<8x96xf32> to vector<8x32xf32>
    %163 = vector.extract_strided_slice %148 {offsets = [0, 64], sizes = [8, 32], strides = [1, 1]} : vector<8x96xf32> to vector<8x32xf32>
    %164 = vector.broadcast %119 : vector<1x32xf32> to vector<8x32xf32>
    %165 = arith.addf %163, %164 : vector<8x32xf32>
    %166 = arith.mulf %160, %165 : vector<8x32xf32>
    %167 = arith.addf %162, %166 : vector<8x32xf32>
    %168 = math.tanh %167 : vector<8x32xf32>
    %cst_47 = arith.constant 1.000000e+00 : f32
    %169 = vector.broadcast %cst_47 : f32 to vector<8x32xf32>
    %170 = arith.subf %169, %161 : vector<8x32xf32>
    %171 = arith.mulf %170, %168 : vector<8x32xf32>
    %172 = arith.mulf %161, %146 : vector<8x32xf32>
    %173 = arith.addf %171, %172 : vector<8x32xf32>
    %c8 = arith.constant 8 : index
    %c0_48 = arith.constant 0 : index
    %174 = vector.load %arg10[%c8, %c0_48] : memref<64x32xf32, #tpu.memory_space<vmem>>, vector<8x32xf32>
    tpu.vector_store %arg10[%c8, %c0_48], %173 {strides = array<i32>} : memref<64x32xf32, #tpu.memory_space<vmem>>, vector<8x32xf32>,
    %cst_49 = arith.constant dense<0.000000e+00> : vector<8x96xf32>
    %175 = tpu.matmul %173, %118, %cst_49 {dimension_numbers = #tpu.dot_dimension_numbers<[1], [0], [0], [1], [0, 0, 1, 1], [], []>} : vector<8x32xf32>, vector<32x96xf32>, vector<8x96xf32> -> vector<8x96xf32>
    %176 = vector.extract_strided_slice %117 {offsets = [16, 0], sizes = [8, 96], strides = [1, 1]} : vector<64x96xf32> to vector<8x96xf32>
    %177 = vector.extract_strided_slice %176 {offsets = [0, 0], sizes = [8, 64], strides = [1, 1]} : vector<8x96xf32> to vector<8x64xf32>
    %178 = vector.extract_strided_slice %175 {offsets = [0, 0], sizes = [8, 64], strides = [1, 1]} : vector<8x96xf32> to vector<8x64xf32>
    %179 = arith.addf %177, %178 : vector<8x64xf32>
    %cst_50 = arith.constant 5.000000e-01 : f32
    %180 = vector.broadcast %cst_50 : f32 to vector<8x64xf32>
    %181 = arith.mulf %180, %179 : vector<8x64xf32>
    %182 = math.tanh %181 : vector<8x64xf32>
    %cst_51 = arith.constant 5.000000e-01 : f32
    %183 = vector.broadcast %cst_51 : f32 to vector<8x64xf32>
    %184 = arith.mulf %183, %182 : vector<8x64xf32>
    %cst_52 = arith.constant 5.000000e-01 : f32
    %185 = vector.broadcast %cst_52 : f32 to vector<8x64xf32>
    %186 = arith.addf %184, %185 : vector<8x64xf32>
    %187 = vector.extract_strided_slice %186 {offsets = [0, 0], sizes = [8, 32], strides = [1, 1]} : vector<8x64xf32> to vector<8x32xf32>
    %188 = vector.extract_strided_slice %186 {offsets = [0, 32], sizes = [8, 32], strides = [1, 1]} : vector<8x64xf32> to vector<8x32xf32>
    %189 = vector.extract_strided_slice %176 {offsets = [0, 64], sizes = [8, 32], strides = [1, 1]} : vector<8x96xf32> to vector<8x32xf32>
    %190 = vector.extract_strided_slice %175 {offsets = [0, 64], sizes = [8, 32], strides = [1, 1]} : vector<8x96xf32> to vector<8x32xf32>
    %191 = vector.broadcast %119 : vector<1x32xf32> to vector<8x32xf32>
    %192 = arith.addf %190, %191 : vector<8x32xf32>
    %193 = arith.mulf %187, %192 : vector<8x32xf32>
    %194 = arith.addf %189, %193 : vector<8x32xf32>
    %195 = math.tanh %194 : vector<8x32xf32>
    %cst_53 = arith.constant 1.000000e+00 : f32
    %196 = vector.broadcast %cst_53 : f32 to vector<8x32xf32>
    %197 = arith.subf %196, %188 : vector<8x32xf32>
    %198 = arith.mulf %197, %195 : vector<8x32xf32>
    %199 = arith.mulf %188, %173 : vector<8x32xf32>
    %200 = arith.addf %198, %199 : vector<8x32xf32>
    %c16 = arith.constant 16 : index
    %c0_54 = arith.constant 0 : index
    %201 = vector.load %arg10[%c16, %c0_54] : memref<64x32xf32, #tpu.memory_space<vmem>>, vector<8x32xf32>
    tpu.vector_store %arg10[%c16, %c0_54], %200 {strides = array<i32>} : memref<64x32xf32, #tpu.memory_space<vmem>>, vector<8x32xf32>,
    %cst_55 = arith.constant dense<0.000000e+00> : vector<8x96xf32>
    %202 = tpu.matmul %200, %118, %cst_55 {dimension_numbers = #tpu.dot_dimension_numbers<[1], [0], [0], [1], [0, 0, 1, 1], [], []>} : vector<8x32xf32>, vector<32x96xf32>, vector<8x96xf32> -> vector<8x96xf32>
    %203 = vector.extract_strided_slice %117 {offsets = [24, 0], sizes = [8, 96], strides = [1, 1]} : vector<64x96xf32> to vector<8x96xf32>
    %204 = vector.extract_strided_slice %203 {offsets = [0, 0], sizes = [8, 64], strides = [1, 1]} : vector<8x96xf32> to vector<8x64xf32>
    %205 = vector.extract_strided_slice %202 {offsets = [0, 0], sizes = [8, 64], strides = [1, 1]} : vector<8x96xf32> to vector<8x64xf32>
    %206 = arith.addf %204, %205 : vector<8x64xf32>
    %cst_56 = arith.constant 5.000000e-01 : f32
    %207 = vector.broadcast %cst_56 : f32 to vector<8x64xf32>
    %208 = arith.mulf %207, %206 : vector<8x64xf32>
    %209 = math.tanh %208 : vector<8x64xf32>
    %cst_57 = arith.constant 5.000000e-01 : f32
    %210 = vector.broadcast %cst_57 : f32 to vector<8x64xf32>
    %211 = arith.mulf %210, %209 : vector<8x64xf32>
    %cst_58 = arith.constant 5.000000e-01 : f32
    %212 = vector.broadcast %cst_58 : f32 to vector<8x64xf32>
    %213 = arith.addf %211, %212 : vector<8x64xf32>
    %214 = vector.extract_strided_slice %213 {offsets = [0, 0], sizes = [8, 32], strides = [1, 1]} : vector<8x64xf32> to vector<8x32xf32>
    %215 = vector.extract_strided_slice %213 {offsets = [0, 32], sizes = [8, 32], strides = [1, 1]} : vector<8x64xf32> to vector<8x32xf32>
    %216 = vector.extract_strided_slice %203 {offsets = [0, 64], sizes = [8, 32], strides = [1, 1]} : vector<8x96xf32> to vector<8x32xf32>
    %217 = vector.extract_strided_slice %202 {offsets = [0, 64], sizes = [8, 32], strides = [1, 1]} : vector<8x96xf32> to vector<8x32xf32>
    %218 = vector.broadcast %119 : vector<1x32xf32> to vector<8x32xf32>
    %219 = arith.addf %217, %218 : vector<8x32xf32>
    %220 = arith.mulf %214, %219 : vector<8x32xf32>
    %221 = arith.addf %216, %220 : vector<8x32xf32>
    %222 = math.tanh %221 : vector<8x32xf32>
    %cst_59 = arith.constant 1.000000e+00 : f32
    %223 = vector.broadcast %cst_59 : f32 to vector<8x32xf32>
    %224 = arith.subf %223, %215 : vector<8x32xf32>
    %225 = arith.mulf %224, %222 : vector<8x32xf32>
    %226 = arith.mulf %215, %200 : vector<8x32xf32>
    %227 = arith.addf %225, %226 : vector<8x32xf32>
    %c24 = arith.constant 24 : index
    %c0_60 = arith.constant 0 : index
    %228 = vector.load %arg10[%c24, %c0_60] : memref<64x32xf32, #tpu.memory_space<vmem>>, vector<8x32xf32>
    tpu.vector_store %arg10[%c24, %c0_60], %227 {strides = array<i32>} : memref<64x32xf32, #tpu.memory_space<vmem>>, vector<8x32xf32>,
    %cst_61 = arith.constant dense<0.000000e+00> : vector<8x96xf32>
    %229 = tpu.matmul %227, %118, %cst_61 {dimension_numbers = #tpu.dot_dimension_numbers<[1], [0], [0], [1], [0, 0, 1, 1], [], []>} : vector<8x32xf32>, vector<32x96xf32>, vector<8x96xf32> -> vector<8x96xf32>
    %230 = vector.extract_strided_slice %117 {offsets = [32, 0], sizes = [8, 96], strides = [1, 1]} : vector<64x96xf32> to vector<8x96xf32>
    %231 = vector.extract_strided_slice %230 {offsets = [0, 0], sizes = [8, 64], strides = [1, 1]} : vector<8x96xf32> to vector<8x64xf32>
    %232 = vector.extract_strided_slice %229 {offsets = [0, 0], sizes = [8, 64], strides = [1, 1]} : vector<8x96xf32> to vector<8x64xf32>
    %233 = arith.addf %231, %232 : vector<8x64xf32>
    %cst_62 = arith.constant 5.000000e-01 : f32
    %234 = vector.broadcast %cst_62 : f32 to vector<8x64xf32>
    %235 = arith.mulf %234, %233 : vector<8x64xf32>
    %236 = math.tanh %235 : vector<8x64xf32>
    %cst_63 = arith.constant 5.000000e-01 : f32
    %237 = vector.broadcast %cst_63 : f32 to vector<8x64xf32>
    %238 = arith.mulf %237, %236 : vector<8x64xf32>
    %cst_64 = arith.constant 5.000000e-01 : f32
    %239 = vector.broadcast %cst_64 : f32 to vector<8x64xf32>
    %240 = arith.addf %238, %239 : vector<8x64xf32>
    %241 = vector.extract_strided_slice %240 {offsets = [0, 0], sizes = [8, 32], strides = [1, 1]} : vector<8x64xf32> to vector<8x32xf32>
    %242 = vector.extract_strided_slice %240 {offsets = [0, 32], sizes = [8, 32], strides = [1, 1]} : vector<8x64xf32> to vector<8x32xf32>
    %243 = vector.extract_strided_slice %230 {offsets = [0, 64], sizes = [8, 32], strides = [1, 1]} : vector<8x96xf32> to vector<8x32xf32>
    %244 = vector.extract_strided_slice %229 {offsets = [0, 64], sizes = [8, 32], strides = [1, 1]} : vector<8x96xf32> to vector<8x32xf32>
    %245 = vector.broadcast %119 : vector<1x32xf32> to vector<8x32xf32>
    %246 = arith.addf %244, %245 : vector<8x32xf32>
    %247 = arith.mulf %241, %246 : vector<8x32xf32>
    %248 = arith.addf %243, %247 : vector<8x32xf32>
    %249 = math.tanh %248 : vector<8x32xf32>
    %cst_65 = arith.constant 1.000000e+00 : f32
    %250 = vector.broadcast %cst_65 : f32 to vector<8x32xf32>
    %251 = arith.subf %250, %242 : vector<8x32xf32>
    %252 = arith.mulf %251, %249 : vector<8x32xf32>
    %253 = arith.mulf %242, %227 : vector<8x32xf32>
    %254 = arith.addf %252, %253 : vector<8x32xf32>
    %c32 = arith.constant 32 : index
    %c0_66 = arith.constant 0 : index
    %255 = vector.load %arg10[%c32, %c0_66] : memref<64x32xf32, #tpu.memory_space<vmem>>, vector<8x32xf32>
    tpu.vector_store %arg10[%c32, %c0_66], %254 {strides = array<i32>} : memref<64x32xf32, #tpu.memory_space<vmem>>, vector<8x32xf32>,
    %cst_67 = arith.constant dense<0.000000e+00> : vector<8x96xf32>
    %256 = tpu.matmul %254, %118, %cst_67 {dimension_numbers = #tpu.dot_dimension_numbers<[1], [0], [0], [1], [0, 0, 1, 1], [], []>} : vector<8x32xf32>, vector<32x96xf32>, vector<8x96xf32> -> vector<8x96xf32>
    %257 = vector.extract_strided_slice %117 {offsets = [40, 0], sizes = [8, 96], strides = [1, 1]} : vector<64x96xf32> to vector<8x96xf32>
    %258 = vector.extract_strided_slice %257 {offsets = [0, 0], sizes = [8, 64], strides = [1, 1]} : vector<8x96xf32> to vector<8x64xf32>
    %259 = vector.extract_strided_slice %256 {offsets = [0, 0], sizes = [8, 64], strides = [1, 1]} : vector<8x96xf32> to vector<8x64xf32>
    %260 = arith.addf %258, %259 : vector<8x64xf32>
    %cst_68 = arith.constant 5.000000e-01 : f32
    %261 = vector.broadcast %cst_68 : f32 to vector<8x64xf32>
    %262 = arith.mulf %261, %260 : vector<8x64xf32>
    %263 = math.tanh %262 : vector<8x64xf32>
    %cst_69 = arith.constant 5.000000e-01 : f32
    %264 = vector.broadcast %cst_69 : f32 to vector<8x64xf32>
    %265 = arith.mulf %264, %263 : vector<8x64xf32>
    %cst_70 = arith.constant 5.000000e-01 : f32
    %266 = vector.broadcast %cst_70 : f32 to vector<8x64xf32>
    %267 = arith.addf %265, %266 : vector<8x64xf32>
    %268 = vector.extract_strided_slice %267 {offsets = [0, 0], sizes = [8, 32], strides = [1, 1]} : vector<8x64xf32> to vector<8x32xf32>
    %269 = vector.extract_strided_slice %267 {offsets = [0, 32], sizes = [8, 32], strides = [1, 1]} : vector<8x64xf32> to vector<8x32xf32>
    %270 = vector.extract_strided_slice %257 {offsets = [0, 64], sizes = [8, 32], strides = [1, 1]} : vector<8x96xf32> to vector<8x32xf32>
    %271 = vector.extract_strided_slice %256 {offsets = [0, 64], sizes = [8, 32], strides = [1, 1]} : vector<8x96xf32> to vector<8x32xf32>
    %272 = vector.broadcast %119 : vector<1x32xf32> to vector<8x32xf32>
    %273 = arith.addf %271, %272 : vector<8x32xf32>
    %274 = arith.mulf %268, %273 : vector<8x32xf32>
    %275 = arith.addf %270, %274 : vector<8x32xf32>
    %276 = math.tanh %275 : vector<8x32xf32>
    %cst_71 = arith.constant 1.000000e+00 : f32
    %277 = vector.broadcast %cst_71 : f32 to vector<8x32xf32>
    %278 = arith.subf %277, %269 : vector<8x32xf32>
    %279 = arith.mulf %278, %276 : vector<8x32xf32>
    %280 = arith.mulf %269, %254 : vector<8x32xf32>
    %281 = arith.addf %279, %280 : vector<8x32xf32>
    %c40 = arith.constant 40 : index
    %c0_72 = arith.constant 0 : index
    %282 = vector.load %arg10[%c40, %c0_72] : memref<64x32xf32, #tpu.memory_space<vmem>>, vector<8x32xf32>
    tpu.vector_store %arg10[%c40, %c0_72], %281 {strides = array<i32>} : memref<64x32xf32, #tpu.memory_space<vmem>>, vector<8x32xf32>,
    %cst_73 = arith.constant dense<0.000000e+00> : vector<8x96xf32>
    %283 = tpu.matmul %281, %118, %cst_73 {dimension_numbers = #tpu.dot_dimension_numbers<[1], [0], [0], [1], [0, 0, 1, 1], [], []>} : vector<8x32xf32>, vector<32x96xf32>, vector<8x96xf32> -> vector<8x96xf32>
    %284 = vector.extract_strided_slice %117 {offsets = [48, 0], sizes = [8, 96], strides = [1, 1]} : vector<64x96xf32> to vector<8x96xf32>
    %285 = vector.extract_strided_slice %284 {offsets = [0, 0], sizes = [8, 64], strides = [1, 1]} : vector<8x96xf32> to vector<8x64xf32>
    %286 = vector.extract_strided_slice %283 {offsets = [0, 0], sizes = [8, 64], strides = [1, 1]} : vector<8x96xf32> to vector<8x64xf32>
    %287 = arith.addf %285, %286 : vector<8x64xf32>
    %cst_74 = arith.constant 5.000000e-01 : f32
    %288 = vector.broadcast %cst_74 : f32 to vector<8x64xf32>
    %289 = arith.mulf %288, %287 : vector<8x64xf32>
    %290 = math.tanh %289 : vector<8x64xf32>
    %cst_75 = arith.constant 5.000000e-01 : f32
    %291 = vector.broadcast %cst_75 : f32 to vector<8x64xf32>
    %292 = arith.mulf %291, %290 : vector<8x64xf32>
    %cst_76 = arith.constant 5.000000e-01 : f32
    %293 = vector.broadcast %cst_76 : f32 to vector<8x64xf32>
    %294 = arith.addf %292, %293 : vector<8x64xf32>
    %295 = vector.extract_strided_slice %294 {offsets = [0, 0], sizes = [8, 32], strides = [1, 1]} : vector<8x64xf32> to vector<8x32xf32>
    %296 = vector.extract_strided_slice %294 {offsets = [0, 32], sizes = [8, 32], strides = [1, 1]} : vector<8x64xf32> to vector<8x32xf32>
    %297 = vector.extract_strided_slice %284 {offsets = [0, 64], sizes = [8, 32], strides = [1, 1]} : vector<8x96xf32> to vector<8x32xf32>
    %298 = vector.extract_strided_slice %283 {offsets = [0, 64], sizes = [8, 32], strides = [1, 1]} : vector<8x96xf32> to vector<8x32xf32>
    %299 = vector.broadcast %119 : vector<1x32xf32> to vector<8x32xf32>
    %300 = arith.addf %298, %299 : vector<8x32xf32>
    %301 = arith.mulf %295, %300 : vector<8x32xf32>
    %302 = arith.addf %297, %301 : vector<8x32xf32>
    %303 = math.tanh %302 : vector<8x32xf32>
    %cst_77 = arith.constant 1.000000e+00 : f32
    %304 = vector.broadcast %cst_77 : f32 to vector<8x32xf32>
    %305 = arith.subf %304, %296 : vector<8x32xf32>
    %306 = arith.mulf %305, %303 : vector<8x32xf32>
    %307 = arith.mulf %296, %281 : vector<8x32xf32>
    %308 = arith.addf %306, %307 : vector<8x32xf32>
    %c48 = arith.constant 48 : index
    %c0_78 = arith.constant 0 : index
    %309 = vector.load %arg10[%c48, %c0_78] : memref<64x32xf32, #tpu.memory_space<vmem>>, vector<8x32xf32>
    tpu.vector_store %arg10[%c48, %c0_78], %308 {strides = array<i32>} : memref<64x32xf32, #tpu.memory_space<vmem>>, vector<8x32xf32>,
    %cst_79 = arith.constant dense<0.000000e+00> : vector<8x96xf32>
    %310 = tpu.matmul %308, %118, %cst_79 {dimension_numbers = #tpu.dot_dimension_numbers<[1], [0], [0], [1], [0, 0, 1, 1], [], []>} : vector<8x32xf32>, vector<32x96xf32>, vector<8x96xf32> -> vector<8x96xf32>
    %311 = vector.extract_strided_slice %117 {offsets = [56, 0], sizes = [8, 96], strides = [1, 1]} : vector<64x96xf32> to vector<8x96xf32>
    %312 = vector.extract_strided_slice %311 {offsets = [0, 0], sizes = [8, 64], strides = [1, 1]} : vector<8x96xf32> to vector<8x64xf32>
    %313 = vector.extract_strided_slice %310 {offsets = [0, 0], sizes = [8, 64], strides = [1, 1]} : vector<8x96xf32> to vector<8x64xf32>
    %314 = arith.addf %312, %313 : vector<8x64xf32>
    %cst_80 = arith.constant 5.000000e-01 : f32
    %315 = vector.broadcast %cst_80 : f32 to vector<8x64xf32>
    %316 = arith.mulf %315, %314 : vector<8x64xf32>
    %317 = math.tanh %316 : vector<8x64xf32>
    %cst_81 = arith.constant 5.000000e-01 : f32
    %318 = vector.broadcast %cst_81 : f32 to vector<8x64xf32>
    %319 = arith.mulf %318, %317 : vector<8x64xf32>
    %cst_82 = arith.constant 5.000000e-01 : f32
    %320 = vector.broadcast %cst_82 : f32 to vector<8x64xf32>
    %321 = arith.addf %319, %320 : vector<8x64xf32>
    %322 = vector.extract_strided_slice %321 {offsets = [0, 0], sizes = [8, 32], strides = [1, 1]} : vector<8x64xf32> to vector<8x32xf32>
    %323 = vector.extract_strided_slice %321 {offsets = [0, 32], sizes = [8, 32], strides = [1, 1]} : vector<8x64xf32> to vector<8x32xf32>
    %324 = vector.extract_strided_slice %311 {offsets = [0, 64], sizes = [8, 32], strides = [1, 1]} : vector<8x96xf32> to vector<8x32xf32>
    %325 = vector.extract_strided_slice %310 {offsets = [0, 64], sizes = [8, 32], strides = [1, 1]} : vector<8x96xf32> to vector<8x32xf32>
    %326 = vector.broadcast %119 : vector<1x32xf32> to vector<8x32xf32>
    %327 = arith.addf %325, %326 : vector<8x32xf32>
    %328 = arith.mulf %322, %327 : vector<8x32xf32>
    %329 = arith.addf %324, %328 : vector<8x32xf32>
    %330 = math.tanh %329 : vector<8x32xf32>
    %cst_83 = arith.constant 1.000000e+00 : f32
    %331 = vector.broadcast %cst_83 : f32 to vector<8x32xf32>
    %332 = arith.subf %331, %323 : vector<8x32xf32>
    %333 = arith.mulf %332, %330 : vector<8x32xf32>
    %334 = arith.mulf %323, %308 : vector<8x32xf32>
    %335 = arith.addf %333, %334 : vector<8x32xf32>
    %c56 = arith.constant 56 : index
    %c0_84 = arith.constant 0 : index
    %336 = vector.load %arg10[%c56, %c0_84] : memref<64x32xf32, #tpu.memory_space<vmem>>, vector<8x32xf32>
    tpu.vector_store %arg10[%c56, %c0_84], %335 {strides = array<i32>} : memref<64x32xf32, #tpu.memory_space<vmem>>, vector<8x32xf32>,
    %c0_85 = arith.constant 0 : index
    %c0_86 = arith.constant 0 : index
    %337 = vector.load %arg9[%c0_85, %c0_86] : memref<8x32xf32, #tpu.memory_space<vmem>>, vector<8x32xf32>
    tpu.vector_store %arg9[%c0_85, %c0_86], %335 {strides = array<i32>} : memref<8x32xf32, #tpu.memory_space<vmem>>, vector<8x32xf32>,
    %c0_87 = arith.constant 0 : index
    %c0_88 = arith.constant 0 : index
    %338 = vector.load %arg10[%c0_87, %c0_88] : memref<64x32xf32, #tpu.memory_space<vmem>>, vector<64x32xf32>
    %339 = vector.extract_strided_slice %1 {offsets = [8, 0], sizes = [1, 32], strides = [1, 1]} : vector<16x128xf32> to vector<1x32xf32>
    %340 = vector.extract_strided_slice %1 {offsets = [9, 0], sizes = [1, 32], strides = [1, 1]} : vector<16x128xf32> to vector<1x32xf32>
    %cst_89 = arith.constant dense<0.000000e+00> : vector<64xf32>
    %341 = vector.multi_reduction <add>, %338, %cst_89 [1] : vector<64x32xf32> to vector<64xf32>
    %342 = vector.shape_cast %341 : vector<64xf32> to vector<64x1xf32>
    %cst_90 = arith.constant 3.200000e+01 : f32
    %343 = vector.broadcast %cst_90 : f32 to vector<64x1xf32>
    %344 = arith.divf %342, %343 : vector<64x1xf32>
    %345 = vector.broadcast %344 : vector<64x1xf32> to vector<64x32xf32>
    %346 = arith.subf %338, %345 : vector<64x32xf32>
    %347 = arith.mulf %346, %346 : vector<64x32xf32>
    %cst_91 = arith.constant dense<0.000000e+00> : vector<64xf32>
    %348 = vector.multi_reduction <add>, %347, %cst_91 [1] : vector<64x32xf32> to vector<64xf32>
    %349 = vector.shape_cast %348 : vector<64xf32> to vector<64x1xf32>
    %cst_92 = arith.constant 3.200000e+01 : f32
    %350 = vector.broadcast %cst_92 : f32 to vector<64x1xf32>
    %351 = arith.divf %349, %350 : vector<64x1xf32>
    %352 = vector.broadcast %344 : vector<64x1xf32> to vector<64x32xf32>
    %353 = arith.subf %338, %352 : vector<64x32xf32>
    %cst_93 = arith.constant 9.99999974E-6 : f32
    %354 = vector.broadcast %cst_93 : f32 to vector<64x1xf32>
    %355 = arith.addf %351, %354 : vector<64x1xf32>
    %356 = math.rsqrt %355 : vector<64x1xf32>
    %357 = vector.broadcast %356 : vector<64x1xf32> to vector<64x32xf32>
    %358 = arith.mulf %353, %357 : vector<64x32xf32>
    %359 = vector.broadcast %339 : vector<1x32xf32> to vector<64x32xf32>
    %360 = arith.mulf %358, %359 : vector<64x32xf32>
    %361 = vector.broadcast %340 : vector<1x32xf32> to vector<64x32xf32>
    %362 = arith.addf %360, %361 : vector<64x32xf32>
    %363 = arith.mulf %362, %67 : vector<64x32xf32>
    %c0_94 = arith.constant 0 : index
    %c0_95 = arith.constant 0 : index
    %364 = vector.load %arg7[%c0_94, %c0_95] : memref<32x16xf32, #tpu.memory_space<vmem>>, vector<32x16xf32>
    %cst_96 = arith.constant dense<0.000000e+00> : vector<64x16xf32>
    %365 = tpu.matmul %363, %364, %cst_96 {dimension_numbers = #tpu.dot_dimension_numbers<[1], [0], [0], [1], [0, 0, 1, 1], [], []>} : vector<64x32xf32>, vector<32x16xf32>, vector<64x16xf32> -> vector<64x16xf32>
    %366 = vector.extract_strided_slice %1 {offsets = [13, 0], sizes = [1, 16], strides = [1, 1]} : vector<16x128xf32> to vector<1x16xf32>
    %367 = vector.broadcast %366 : vector<1x16xf32> to vector<64x16xf32>
    %368 = arith.addf %365, %367 : vector<64x16xf32>
    %369 = arith.addf %368, %0 : vector<64x16xf32>
    %c0_97 = arith.constant 0 : index
    %c0_98 = arith.constant 0 : index
    %370 = vector.load %arg8[%c0_97, %c0_98] : memref<64x16xf32, #tpu.memory_space<vmem>>, vector<64x16xf32>
    tpu.vector_store %arg8[%c0_97, %c0_98], %369 {strides = array<i32>} : memref<64x16xf32, #tpu.memory_space<vmem>>, vector<64x16xf32>,
    return
  }
  func.func @transform_0(%arg0: i32) -> (i32, i32) {
    %c0_i32 = arith.constant 0 : i32
    %c0_i32_0 = arith.constant 0 : i32
    %c0_i32_1 = arith.constant 0 : i32
    return %c0_i32, %c0_i32_0 : i32, i32
  }
  func.func @transform_1(%arg0: i32) -> (i32, i32) {
    %c0_i32 = arith.constant 0 : i32
    %c0_i32_0 = arith.constant 0 : i32
    %c0_i32_1 = arith.constant 0 : i32
    return %c0_i32, %c0_i32_0 : i32, i32
  }
  func.func @transform_2(%arg0: i32) -> (i32, i32) {
    %c0_i32 = arith.constant 0 : i32
    %c0_i32_0 = arith.constant 0 : i32
    %c0_i32_1 = arith.constant 0 : i32
    return %c0_i32, %c0_i32_0 : i32, i32
  }
  func.func @transform_3(%arg0: i32) -> (i32, i32) {
    %c0_i32 = arith.constant 0 : i32
    %c0_i32_0 = arith.constant 0 : i32
    %c0_i32_1 = arith.constant 0 : i32
    return %c0_i32, %c0_i32_0 : i32, i32
  }
  func.func @transform_4(%arg0: i32) -> (i32, i32) {
    %c0_i32 = arith.constant 0 : i32
    %c0_i32_0 = arith.constant 0 : i32
    %c0_i32_1 = arith.constant 0 : i32
    return %c0_i32, %c0_i32_0 : i32, i32
  }
  func.func @transform_5(%arg0: i32) -> (i32, i32) {
    %c0_i32 = arith.constant 0 : i32
    %c0_i32_0 = arith.constant 0 : i32
    %c0_i32_1 = arith.constant 0 : i32
    return %c0_i32, %c0_i32_0 : i32, i32
  }
  func.func @transform_6(%arg0: i32) -> (i32, i32) {
    %c0_i32 = arith.constant 0 : i32
    %c0_i32_0 = arith.constant 0 : i32
    %c0_i32_1 = arith.constant 0 : i32
    return %c0_i32, %c0_i32_0 : i32, i32
  }
  func.func @transform_7(%arg0: i32) -> (i32, i32) {
    %c0_i32 = arith.constant 0 : i32
    %c0_i32_0 = arith.constant 0 : i32
    %c0_i32_1 = arith.constant 0 : i32
    return %c0_i32, %c0_i32_0 : i32, i32
  }
  func.func @transform_8(%arg0: i32) -> (i32, i32) {
    %c0_i32 = arith.constant 0 : i32
    %c0_i32_0 = arith.constant 0 : i32
    %c0_i32_1 = arith.constant 0 : i32
    return %c0_i32, %c0_i32_0 : i32, i32
  }
}

</mosaic_0001>

<llo_original>
// kernel: tpu_custom_call.1
$region0: #{tpu_custom_call.1}
  #allocation0 [shape = 'u32[]', space=smem, size = 0x4, offset = 0x4, fixed_abs, tag = 'smem constant byte address 0x4 - core index']
  #allocation1 [shape = 'u32[144,128]{1,0:T(1,128)}', space=vmem, size = 0x12000, scoped, tag = 'internal scratch']
  #allocation2 [shape = 'f32[64,32]{1,0:T(8,128)}', space=vmem, size = 0x8000, scoped, tag = 'scratch operand']
  %s0 = inlined_call_operand.vmem [shape: f32[64,16], index: 0, kind: input, shape index: {}]
  %s1 = inlined_call_operand.vmem [shape: f32[16,128], index: 1, kind: input, shape index: {}]
  %s2 = inlined_call_operand.vmem [shape: f32[16,64], index: 2, kind: input, shape index: {}]
  %s3 = inlined_call_operand.vmem [shape: f32[32,96], index: 3, kind: input, shape index: {}]
  %s4 = inlined_call_operand.vmem [shape: f32[32,96], index: 4, kind: input, shape index: {}]
  %s5 = inlined_call_operand.vmem [shape: f32[32,96], index: 5, kind: input, shape index: {}]
  %s6 = inlined_call_operand.vmem [shape: f32[32,16], index: 6, kind: input, shape index: {}]
  %s7 = inlined_call_operand.vmem [shape: f32[64,16], index: 7, kind: output, shape index: {0}]
  %s8 = inlined_call_operand.hbm [shape: f32[8,32], index: 8, kind: output, shape index: {1}]
  %9 = xla_tuple %s7, %s8
  %s10 = sld [smem:[#allocation0]]
  $region46: #{tpu_custom_call.1} parent=0
    _
  %s12 = ssub.s32 1, %s10
  %s13 = scalar_select 0, %s12, %s10
  $region1: #{tpu_custom_call.1} parent=0
    #allocation3 [shape = 'u8[4096]{0}', space=vmem, size = 0x1000, scoped, tag = 'output window, operand 1, single buffered']
    #allocation4 [shape = 's32[1]{0}', space=sflag, size = 0x4, scoped, tag = 'scoped memory for tpu_custom_call.1']
    %14 = vsyncpa [#allocation4], 0
    // Predicated region
    $region2: #{tpu_custom_call.1} parent=1 // pred_check
      _
    $region3: #{tpu_custom_call.1} parent=1 // pred_check_branch
      %16 = sbr.rel (0) target = $region5
    $region4: #{tpu_custom_call.1} parent=1 // pred_region
      _
    $region5: #{tpu_custom_call.1} parent=1 // pred_fallthru
      _
    // Predicated region
    $region6: #{tpu_custom_call.1} parent=1 // pred_check
      _
    $region7: #{tpu_custom_call.1} parent=1 // pred_check_branch
      %18 = sbr.rel (0) target = $region9
    $region8: #{tpu_custom_call.1} parent=1 // pred_region
      _
    $region9: #{tpu_custom_call.1} parent=1 // pred_fallthru
      _
    // Predicated region
    $region10: #{tpu_custom_call.1} parent=1 // pred_check
      _
    $region11: #{tpu_custom_call.1} parent=1 // pred_check_branch
      %20 = sbr.rel (0) target = $region13
    $region12: #{tpu_custom_call.1} parent=1 // pred_region
      _
    $region13: #{tpu_custom_call.1} parent=1 // pred_fallthru
      _
    // Predicated region
    $region14: #{tpu_custom_call.1} parent=1 // pred_check
      _
    $region15: #{tpu_custom_call.1} parent=1 // pred_check_branch
      %22 = sbr.rel (0) target = $region17
    $region16: #{tpu_custom_call.1} parent=1 // pred_region
      _
    $region17: #{tpu_custom_call.1} parent=1 // pred_fallthru
      _
    // Predicated region
    $region18: #{tpu_custom_call.1} parent=1 // pred_check
      _
    $region19: #{tpu_custom_call.1} parent=1 // pred_check_branch
      %24 = sbr.rel (0) target = $region21
    $region20: #{tpu_custom_call.1} parent=1 // pred_region
      _
    $region21: #{tpu_custom_call.1} parent=1 // pred_fallthru
      _
    // Predicated region
    $region22: #{tpu_custom_call.1} parent=1 // pred_check
      _
    $region23: #{tpu_custom_call.1} parent=1 // pred_check_branch
      %26 = sbr.rel (0) target = $region25
    $region24: #{tpu_custom_call.1} parent=1 // pred_region
      _
    $region25: #{tpu_custom_call.1} parent=1 // pred_fallthru
      _
    // Predicated region
    $region26: #{tpu_custom_call.1} parent=1 // pred_check
      _
    $region27: #{tpu_custom_call.1} parent=1 // pred_check_branch
      %28 = sbr.rel (0) target = $region29
    $region28: #{tpu_custom_call.1} parent=1 // pred_region
      _
    $region29: #{tpu_custom_call.1} parent=1 // pred_fallthru
      _
    %v29 = vld [vmem:[%s0] sm:$0xff]
    %v30 = vld [vmem:[%s0 + $0x8] sm:$0xff]
    %v31 = vld [vmem:[%s0 + $0x10] sm:$0xff]
    %v32 = vld [vmem:[%s0 + $0x18] sm:$0xff]
    %v33 = vld [vmem:[%s0 + $0x20] sm:$0xff]
    %v34 = vld [vmem:[%s0 + $0x28] sm:$0xff]
    %v35 = vld [vmem:[%s0 + $0x30] sm:$0xff]
    %v36 = vld [vmem:[%s0 + $0x38] sm:$0xff]
    %v37 = vld [vmem:[%s1] sm:$0xff]
    %v38 = vld [vmem:[%s1 + $0x8] sm:$0xff]
    %v39 = vld [vmem:[%s2] sm:$0xff]
    %v40 = vld [vmem:[%s2 + $0x8] sm:$0xff]
    %vm41 = vcmask 130048
    %v43 = vsel %vm41, %v29, 0
    %v46 = vsel %vm41, %v30, 0
    %v49 = vsel %vm41, %v31, 0
    %v52 = vsel %vm41, %v32, 0
    %v55 = vsel %vm41, %v33, 0
    %v58 = vsel %vm41, %v34, 0
    %v61 = vsel %vm41, %v35, 0
    %v64 = vsel %vm41, %v36, 0
    %66 = vmatprep.subr.mxu0 0.0
    %67 = vmatpush1.msra.mxu0 %v39
    %68 = vmatprep.subr.mxu0 0.0
    %69 = vmatpush1.msra.mxu0 %v40
    %70 = vmatprep.subr.mxu0 0.0
    %71 = vmatpush1.msra.mxu0 0.0
    %72 = vmatprep.subr.mxu0 0.0
    %73 = vmatpush1.msra.mxu0 0.0
    %74 = vmatprep.subr.mxu0 0.0
    %75 = vmatpush1.msra.mxu0 0.0
    %76 = vmatprep.subr.mxu0 0.0
    %77 = vmatpush1.msra.mxu0 0.0
    %78 = vmatprep.subr.mxu0 0.0
    %79 = vmatpush1.msra.mxu0 0.0
    %80 = vmatprep.subr.mxu0 0.0
    %81 = vmatpush1.msra.mxu0 0.0
    %82 = vmatprep.subr.mxu0 0.0
    %83 = vmatpush1.msra.mxu0 0.0
    %84 = vmatprep.subr.mxu0 0.0
    %85 = vmatpush1.msra.mxu0 0.0
    %86 = vmatprep.subr.mxu0 0.0
    %87 = vmatpush1.msra.mxu0 0.0
    %88 = vmatprep.subr.mxu0 0.0
    %89 = vmatpush1.msra.mxu0 0.0
    %90 = vmatprep.subr.mxu0 0.0
    %91 = vmatpush1.msra.mxu0 0.0
    %92 = vmatprep.subr.mxu0 0.0
    %93 = vmatpush1.msra.mxu0 0.0
    %94 = vmatprep.subr.mxu0 0.0
    %95 = vmatpush1.msra.mxu0 0.0
    %96 = vmatprep.subr.mxu0 0.0
    %97 = vmatpush1.msra.mxu0 0.0
    %98 = vmatprep.subr.mxu0 0.0
    %99 = vmatpush1.msra.mxu0 0.0
    %100 = vmatprep.subr.mxu0 0.0
    %101 = vmatpush1.msra.mxu0 0.0
    %102 = vmatprep.subr.mxu0 0.0
    %103 = vmatpush1.msra.mxu0 0.0
    %104 = vmatprep.subr.mxu0 0.0
    %105 = vmatpush1.msra.mxu0 0.0
    %106 = vmatprep.subr.mxu0 0.0
    %107 = vmatpush1.msra.mxu0 0.0
    %108 = vmatprep.subr.mxu0 0.0
    %109 = vmatpush1.msra.mxu0 0.0
    %110 = vmatprep.subr.mxu0 0.0
    %111 = vmatpush1.msra.mxu0 0.0
    %112 = vmatprep.subr.mxu0 0.0
    %113 = vmatpush1.msra.mxu0 0.0
    %114 = vmatprep.subr.mxu0 0.0
    %115 = vmatpush1.msra.mxu0 0.0
    %116 = vmatprep.subr.mxu0 0.0
    %117 = vmatpush1.msra.mxu0 0.0
    %118 = vmatprep.subr.mxu0 0.0
    %119 = vmatpush1.msra.mxu0 0.0
    %120 = vmatprep.subr.mxu0 0.0
    %121 = vmatpush1.msra.mxu0 0.0
    %122 = vmatprep.subr.mxu0 0.0
    %123 = vmatpush1.msra.mxu0 0.0
    %124 = vmatprep.subr.mxu0 0.0
    %125 = vmatpush1.msra.mxu0 0.0
    %126 = vmatprep.subr.mxu0 0.0
    %127 = vmatpush1.msra.mxu0 0.0
    %128 = vmatprep.subr.mxu0 0.0
    %129 = vmatpush1.msra.mxu0 0.0
    %130 = vmatprep.mubr.f32.mxu0 0.0
    %131 = vmatmul.mubr.f32.gmra.mrb[0].mxu0 %v43
    %v132 = vpop.f32.mrb[0].mxu0
    %v133 = vadd.f32 0.0, %v132
    %v134 = vpop.f32.mrb[0].mxu0
    %135 = vmatprep.mubr.f32.mxu0 0.0
    %136 = vmatmul.mubr.f32.gmra.mrb[0].mxu0 %v46
    %v137 = vpop.f32.mrb[0].mxu0
    %v138 = vadd.f32 0.0, %v137
    %v139 = vpop.f32.mrb[0].mxu0
    %140 = vmatprep.mubr.f32.mxu0 0.0
    %141 = vmatmul.mubr.f32.gmra.mrb[0].mxu0 %v49
    %v142 = vpop.f32.mrb[0].mxu0
    %v143 = vadd.f32 0.0, %v142
    %v144 = vpop.f32.mrb[0].mxu0
    %145 = vmatprep.mubr.f32.mxu0 0.0
    %146 = vmatmul.mubr.f32.gmra.mrb[0].mxu0 %v52
    %v147 = vpop.f32.mrb[0].mxu0
    %v148 = vadd.f32 0.0, %v147
    %v149 = vpop.f32.mrb[0].mxu0
    %150 = vmatprep.mubr.f32.mxu0 0.0
    %151 = vmatmul.mubr.f32.gmra.mrb[0].mxu0 %v55
    %v152 = vpop.f32.mrb[0].mxu0
    %v153 = vadd.f32 0.0, %v152
    %v154 = vpop.f32.mrb[0].mxu0
    %155 = vmatprep.mubr.f32.mxu0 0.0
    %156 = vmatmul.mubr.f32.gmra.mrb[0].mxu0 %v58
    %v157 = vpop.f32.mrb[0].mxu0
    %v158 = vadd.f32 0.0, %v157
    %v159 = vpop.f32.mrb[0].mxu0
    %160 = vmatprep.mubr.f32.mxu0 0.0
    %161 = vmatmul.mubr.f32.gmra.mrb[0].mxu0 %v61
    %v162 = vpop.f32.mrb[0].mxu0
    %v163 = vadd.f32 0.0, %v162
    %v164 = vpop.f32.mrb[0].mxu0
    %165 = vmatprep.mubr.f32.mxu0 0.0
    %166 = vmatmul.mubr.f32.gmra.mrb[0].mxu0 %v64
    %v167 = vpop.f32.mrb[0].mxu0
    %v168 = vadd.f32 0.0, %v167
    %v169 = vpop.f32.mrb[0].mxu0
    %170 = vdwg.mxu0
    %v171 = vlaneseq
    %v172 = vshrl.u32 %v171, 7
    %v173 = vsub.s32 0, %v172
    %v174 = vrot.slane %v37, %v173
    %v175 = vadd.f32 %v133, %v174
    %v176 = vadd.f32 %v138, %v174
    %v177 = vadd.f32 %v143, %v174
    %v178 = vadd.f32 %v148, %v174
    %v179 = vadd.f32 %v153, %v174
    %v180 = vadd.f32 %v158, %v174
    %v181 = vadd.f32 %v163, %v174
    %v182 = vadd.f32 %v168, %v174
    %vm183 = vcmask 261120
    %v184 = vsel %vm183, %v175, 0.0
    %185 = vadd.xlane.f32.xlu0 %v184
    %v186 = vpop.xlane.xlu0 %185
    %v187 = vsel %vm183, %v176, 0.0
    %188 = vadd.xlane.f32.xlu0 %v187
    %v189 = vpop.xlane.xlu0 %188
    %v190 = vsel %vm183, %v177, 0.0
    %191 = vadd.xlane.f32.xlu0 %v190
    %v192 = vpop.xlane.xlu0 %191
    %v193 = vsel %vm183, %v178, 0.0
    %194 = vadd.xlane.f32.xlu0 %v193
    %v195 = vpop.xlane.xlu0 %194
    %v196 = vsel %vm183, %v179, 0.0
    %197 = vadd.xlane.f32.xlu0 %v196
    %v198 = vpop.xlane.xlu0 %197
    %v199 = vsel %vm183, %v180, 0.0
    %200 = vadd.xlane.f32.xlu0 %v199
    %v201 = vpop.xlane.xlu0 %200
    %v202 = vsel %vm183, %v181, 0.0
    %203 = vadd.xlane.f32.xlu0 %v202
    %v204 = vpop.xlane.xlu0 %203
    %v205 = vsel %vm183, %v182, 0.0
    %206 = vadd.xlane.f32.xlu0 %v205
    %v207 = vpop.xlane.xlu0 %206
    %v208 = vrcp.pop 32.0
    %v209 = vmul.f32 %v186, %v208
    %v210 = vmul.f32 %v189, %v208
    %v211 = vmul.f32 %v192, %v208
    %v212 = vmul.f32 %v195, %v208
    %v213 = vmul.f32 %v198, %v208
    %v214 = vmul.f32 %v201, %v208
    %v215 = vmul.f32 %v204, %v208
    %v216 = vmul.f32 %v207, %v208
    %v217 = vsub.f32 %v175, %v209
    %v218 = vsub.f32 %v176, %v210
    %v219 = vsub.f32 %v177, %v211
    %v220 = vsub.f32 %v178, %v212
    %v221 = vsub.f32 %v179, %v213
    %v222 = vsub.f32 %v180, %v214
    %v223 = vsub.f32 %v181, %v215
    %v224 = vsub.f32 %v182, %v216
    %v225 = vmul.f32 %v217, %v217
    %v226 = vmul.f32 %v218, %v218
    %v227 = vmul.f32 %v219, %v219
    %v228 = vmul.f32 %v220, %v220
    %v229 = vmul.f32 %v221, %v221
    %v230 = vmul.f32 %v222, %v222
    %v231 = vmul.f32 %v223, %v223
    %v232 = vmul.f32 %v224, %v224
    %v233 = vsel %vm183, %v225, 0.0
    %234 = vadd.xlane.f32.xlu0 %v233
    %v235 = vpop.xlane.xlu0 %234
    %v236 = vsel %vm183, %v226, 0.0
    %237 = vadd.xlane.f32.xlu0 %v236
    %v238 = vpop.xlane.xlu0 %237
    %v239 = vsel %vm183, %v227, 0.0
    %240 = vadd.xlane.f32.xlu0 %v239
    %v241 = vpop.xlane.xlu0 %240
    %v242 = vsel %vm183, %v228, 0.0
    %243 = vadd.xlane.f32.xlu0 %v242
    %v244 = vpop.xlane.xlu0 %243
    %v245 = vsel %vm183, %v229, 0.0
    %246 = vadd.xlane.f32.xlu0 %v245
    %v247 = vpop.xlane.xlu0 %246
    %v248 = vsel %vm183, %v230, 0.0
    %249 = vadd.xlane.f32.xlu0 %v248
    %v250 = vpop.xlane.xlu0 %249
    %v251 = vsel %vm183, %v231, 0.0
    %252 = vadd.xlane.f32.xlu0 %v251
    %v253 = vpop.xlane.xlu0 %252
    %v254 = vsel %vm183, %v232, 0.0
    %255 = vadd.xlane.f32.xlu0 %v254
    %v256 = vpop.xlane.xlu0 %255
    %v257 = vmul.f32 %v235, %v208
    %v258 = vmul.f32 %v238, %v208
    %v259 = vmul.f32 %v241, %v208
    %v260 = vmul.f32 %v244, %v208
    %v261 = vmul.f32 %v247, %v208
    %v262 = vmul.f32 %v250, %v208
    %v263 = vmul.f32 %v253, %v208
    %v264 = vmul.f32 %v256, %v208
    %v265 = vadd.f32 %v257, 1e-05
    %v266 = vadd.f32 %v258, 1e-05
    %v267 = vadd.f32 %v259, 1e-05
    %v268 = vadd.f32 %v260, 1e-05
    %v269 = vadd.f32 %v261, 1e-05
    %v270 = vadd.f32 %v262, 1e-05
    %v271 = vadd.f32 %v263, 1e-05
    %v272 = vadd.f32 %v264, 1e-05
    %v273 = vrsqrt.pop %v265
    %v274 = vrsqrt.pop %v266
    %v275 = vrsqrt.pop %v267
    %v276 = vrsqrt.pop %v268
    %v277 = vrsqrt.pop %v269
    %v278 = vrsqrt.pop %v270
    %v279 = vrsqrt.pop %v271
    %v280 = vrsqrt.pop %v272
    %v281 = vmul.f32 %v217, %v273
    %v282 = vmul.f32 %v218, %v274
    %v283 = vmul.f32 %v219, %v275
    %v284 = vmul.f32 %v220, %v276
    %v285 = vmul.f32 %v221, %v277
    %v286 = vmul.f32 %v222, %v278
    %v287 = vmul.f32 %v223, %v279
    %v288 = vmul.f32 %v224, %v280
    %v289 = vlaneseq
    %v290 = vshrl.u32 %v289, 7
    %v291 = vsub.s32 1, %v290
    %v292 = vrot.slane %v37, %v291
    %v293 = vmul.f32 %v281, %v292
    %v294 = vmul.f32 %v282, %v292
    %v295 = vmul.f32 %v283, %v292
    %v296 = vmul.f32 %v284, %v292
    %v297 = vmul.f32 %v285, %v292
    %v298 = vmul.f32 %v286, %v292
    %v299 = vmul.f32 %v287, %v292
    %v300 = vmul.f32 %v288, %v292
    %v301 = vlaneseq
    %v302 = vshrl.u32 %v301, 7
    %v303 = vsub.s32 2, %v302
    %v304 = vrot.slane %v37, %v303
    %v305 = vadd.f32 %v293, %v304
    %v306 = vadd.f32 %v294, %v304
    %v307 = vadd.f32 %v295, %v304
    %v308 = vadd.f32 %v296, %v304
    %v309 = vadd.f32 %v297, %v304
    %v310 = vadd.f32 %v298, %v304
    %v311 = vadd.f32 %v299, %v304
    %v312 = vadd.f32 %v300, %v304
    %v313 = vlaneseq
    %v314 = vshrl.u32 %v313, 7
    %v315 = vsub.s32 2, %v314
    %v316 = vrot.slane %v38, %v315
    %318 = vrot.lane.b32.xlu0 %v316, 32
    %v319 = vpop.permute.xlu0 %318
    %v321 = vadd.f32 %v133, %v319
    %v322 = vadd.f32 %v138, %v319
    %v323 = vadd.f32 %v143, %v319
    %v324 = vadd.f32 %v148, %v319
    %v325 = vadd.f32 %v153, %v319
    %v326 = vadd.f32 %v158, %v319
    %v327 = vadd.f32 %v163, %v319
    %v328 = vadd.f32 %v168, %v319
    %337 = vrot.lane.b32.xlu0 %v321, 96
    %v338 = vpop.permute.xlu0 %337
    %339 = vrot.lane.b32.xlu0 %v322, 96
    %v340 = vpop.permute.xlu0 %339
    %341 = vrot.lane.b32.xlu0 %v323, 96
    %v342 = vpop.permute.xlu0 %341
    %343 = vrot.lane.b32.xlu0 %v324, 96
    %v344 = vpop.permute.xlu0 %343
    %345 = vrot.lane.b32.xlu0 %v325, 96
    %v346 = vpop.permute.xlu0 %345
    %347 = vrot.lane.b32.xlu0 %v326, 96
    %v348 = vpop.permute.xlu0 %347
    %349 = vrot.lane.b32.xlu0 %v327, 96
    %v350 = vpop.permute.xlu0 %349
    %351 = vrot.lane.b32.xlu0 %v328, 96
    %v352 = vpop.permute.xlu0 %351
    %v361 = vsel %vm183, %v338, 0.0
    %362 = vadd.xlane.f32.xlu0 %v361
    %v363 = vpop.xlane.xlu0 %362
    %v364 = vsel %vm183, %v340, 0.0
    %365 = vadd.xlane.f32.xlu0 %v364
    %v366 = vpop.xlane.xlu0 %365
    %v367 = vsel %vm183, %v342, 0.0
    %368 = vadd.xlane.f32.xlu0 %v367
    %v369 = vpop.xlane.xlu0 %368
    %v370 = vsel %vm183, %v344, 0.0
    %371 = vadd.xlane.f32.xlu0 %v370
    %v372 = vpop.xlane.xlu0 %371
    %v373 = vsel %vm183, %v346, 0.0
    %374 = vadd.xlane.f32.xlu0 %v373
    %v375 = vpop.xlane.xlu0 %374
    %v376 = vsel %vm183, %v348, 0.0
    %377 = vadd.xlane.f32.xlu0 %v376
    %v378 = vpop.xlane.xlu0 %377
    %v379 = vsel %vm183, %v350, 0.0
    %380 = vadd.xlane.f32.xlu0 %v379
    %v381 = vpop.xlane.xlu0 %380
    %v382 = vsel %vm183, %v352, 0.0
    %383 = vadd.xlane.f32.xlu0 %v382
    %v384 = vpop.xlane.xlu0 %383
    %v385 = vmul.f32 %v363, %v208
    %v386 = vmul.f32 %v366, %v208
    %v387 = vmul.f32 %v369, %v208
    %v388 = vmul.f32 %v372, %v208
    %v389 = vmul.f32 %v375, %v208
    %v390 = vmul.f32 %v378, %v208
    %v391 = vmul.f32 %v381, %v208
    %v392 = vmul.f32 %v384, %v208
    %v393 = vsub.f32 %v321, %v385
    %v394 = vsub.f32 %v322, %v386
    %v395 = vsub.f32 %v323, %v387
    %v396 = vsub.f32 %v324, %v388
    %v397 = vsub.f32 %v325, %v389
    %v398 = vsub.f32 %v326, %v390
    %v399 = vsub.f32 %v327, %v391
    %v400 = vsub.f32 %v328, %v392
    %v401 = vmul.f32 %v393, %v393
    %v402 = vmul.f32 %v394, %v394
    %v403 = vmul.f32 %v395, %v395
    %v404 = vmul.f32 %v396, %v396
    %v405 = vmul.f32 %v397, %v397
    %v406 = vmul.f32 %v398, %v398
    %v407 = vmul.f32 %v399, %v399
    %v408 = vmul.f32 %v400, %v400
    %417 = vrot.lane.b32.xlu0 %v401, 96
    %v418 = vpop.permute.xlu0 %417
    %419 = vrot.lane.b32.xlu0 %v402, 96
    %v420 = vpop.permute.xlu0 %419
    %421 = vrot.lane.b32.xlu0 %v403, 96
    %v422 = vpop.permute.xlu0 %421
    %423 = vrot.lane.b32.xlu0 %v404, 96
    %v424 = vpop.permute.xlu0 %423
    %425 = vrot.lane.b32.xlu0 %v405, 96
    %v426 = vpop.permute.xlu0 %425
    %427 = vrot.lane.b32.xlu0 %v406, 96
    %v428 = vpop.permute.xlu0 %427
    %429 = vrot.lane.b32.xlu0 %v407, 96
    %v430 = vpop.permute.xlu0 %429
    %431 = vrot.lane.b32.xlu0 %v408, 96
    %v432 = vpop.permute.xlu0 %431
    %v441 = vsel %vm183, %v418, 0.0
    %442 = vadd.xlane.f32.xlu0 %v441
    %v443 = vpop.xlane.xlu0 %442
    %v444 = vsel %vm183, %v420, 0.0
    %445 = vadd.xlane.f32.xlu0 %v444
    %v446 = vpop.xlane.xlu0 %445
    %v447 = vsel %vm183, %v422, 0.0
    %448 = vadd.xlane.f32.xlu0 %v447
    %v449 = vpop.xlane.xlu0 %448
    %v450 = vsel %vm183, %v424, 0.0
    %451 = vadd.xlane.f32.xlu0 %v450
    %v452 = vpop.xlane.xlu0 %451
    %v453 = vsel %vm183, %v426, 0.0
    %454 = vadd.xlane.f32.xlu0 %v453
    %v455 = vpop.xlane.xlu0 %454
    %v456 = vsel %vm183, %v428, 0.0
    %457 = vadd.xlane.f32.xlu0 %v456
    %v458 = vpop.xlane.xlu0 %457
    %v459 = vsel %vm183, %v430, 0.0
    %460 = vadd.xlane.f32.xlu0 %v459
    %v461 = vpop.xlane.xlu0 %460
    %v462 = vsel %vm183, %v432, 0.0
    %463 = vadd.xlane.f32.xlu0 %v462
    %v464 = vpop.xlane.xlu0 %463
    %v465 = vmul.f32 %v443, %v208
    %v466 = vmul.f32 %v446, %v208
    %v467 = vmul.f32 %v449, %v208
    %v468 = vmul.f32 %v452, %v208
    %v469 = vmul.f32 %v455, %v208
    %v470 = vmul.f32 %v458, %v208
    %v471 = vmul.f32 %v461, %v208
    %v472 = vmul.f32 %v464, %v208
    %v473 = vadd.f32 %v465, 1e-05
    %v474 = vadd.f32 %v466, 1e-05
    %v475 = vadd.f32 %v467, 1e-05
    %v476 = vadd.f32 %v468, 1e-05
    %v477 = vadd.f32 %v469, 1e-05
    %v478 = vadd.f32 %v470, 1e-05
    %v479 = vadd.f32 %v471, 1e-05
    %v480 = vadd.f32 %v472, 1e-05
    %v481 = vrsqrt.pop %v473
    %v482 = vrsqrt.pop %v474
    %v483 = vrsqrt.pop %v475
    %v484 = vrsqrt.pop %v476
    %v485 = vrsqrt.pop %v477
    %v486 = vrsqrt.pop %v478
    %v487 = vrsqrt.pop %v479
    %v488 = vrsqrt.pop %v480
    %v489 = vmul.f32 %v393, %v481
    %v490 = vmul.f32 %v394, %v482
    %v491 = vmul.f32 %v395, %v483
    %v492 = vmul.f32 %v396, %v484
    %v493 = vmul.f32 %v397, %v485
    %v494 = vmul.f32 %v398, %v486
    %v495 = vmul.f32 %v399, %v487
    %v496 = vmul.f32 %v400, %v488
    %v497 = vlaneseq
    %v498 = vshrl.u32 %v497, 7
    %v499 = vsub.s32 3, %v498
    %v500 = vrot.slane %v38, %v499
    %502 = vrot.lane.b32.xlu0 %v500, 32
    %v503 = vpop.permute.xlu0 %502
    %v505 = vmul.f32 %v489, %v503
    %v506 = vmul.f32 %v490, %v503
    %v507 = vmul.f32 %v491, %v503
    %v508 = vmul.f32 %v492, %v503
    %v509 = vmul.f32 %v493, %v503
    %v510 = vmul.f32 %v494, %v503
    %v511 = vmul.f32 %v495, %v503
    %v512 = vmul.f32 %v496, %v503
    %v513 = vlaneseq
    %v514 = vshrl.u32 %v513, 7
    %v515 = vsub.s32 4, %v514
    %v516 = vrot.slane %v38, %v515
    %518 = vrot.lane.b32.xlu0 %v516, 32
    %v519 = vpop.permute.xlu0 %518
    %v521 = vadd.f32 %v505, %v519
    %v522 = vadd.f32 %v506, %v519
    %v523 = vadd.f32 %v507, %v519
    %v524 = vadd.f32 %v508, %v519
    %v525 = vadd.f32 %v509, %v519
    %v526 = vadd.f32 %v510, %v519
    %v527 = vadd.f32 %v511, %v519
    %v528 = vadd.f32 %v512, %v519
    %v529 = vmul.f32 %v521, 0.5
    %v530 = vmul.f32 %v522, 0.5
    %v531 = vmul.f32 %v523, 0.5
    %v532 = vmul.f32 %v524, 0.5
    %v533 = vmul.f32 %v525, 0.5
    %v534 = vmul.f32 %v526, 0.5
    %v535 = vmul.f32 %v527, 0.5
    %v536 = vmul.f32 %v528, 0.5
    %v537 = vtanh.pop %v529
    %v538 = vtanh.pop %v530
    %v539 = vtanh.pop %v531
    %v540 = vtanh.pop %v532
    %v541 = vtanh.pop %v533
    %v542 = vtanh.pop %v534
    %v543 = vtanh.pop %v535
    %v544 = vtanh.pop %v536
    %v545 = vmul.f32 %v537, 0.5
    %v546 = vmul.f32 %v538, 0.5
    %v547 = vmul.f32 %v539, 0.5
    %v548 = vmul.f32 %v540, 0.5
    %v549 = vmul.f32 %v541, 0.5
    %v550 = vmul.f32 %v542, 0.5
    %v551 = vmul.f32 %v543, 0.5
    %v552 = vmul.f32 %v544, 0.5
    %v553 = vadd.f32 %v545, 0.5
    %v554 = vadd.f32 %v546, 0.5
    %v555 = vadd.f32 %v547, 0.5
    %v556 = vadd.f32 %v548, 0.5
    %v557 = vadd.f32 %v549, 0.5
    %v558 = vadd.f32 %v550, 0.5
    %v559 = vadd.f32 %v551, 0.5
    %v560 = vadd.f32 %v552, 0.5
    %v561 = vmul.f32 %v521, %v553
    %v562 = vmul.f32 %v522, %v554
    %v563 = vmul.f32 %v523, %v555
    %v564 = vmul.f32 %v524, %v556
    %v565 = vmul.f32 %v525, %v557
    %v566 = vmul.f32 %v526, %v558
    %v567 = vmul.f32 %v527, %v559
    %v568 = vmul.f32 %v528, %v560
    %v569 = vld [vmem:[%s3] sm:$0xff]
    %v570 = vld [vmem:[%s3 + $0x8] sm:$0xff]
    %v571 = vld [vmem:[%s3 + $0x10] sm:$0xff]
    %v572 = vld [vmem:[%s3 + $0x18] sm:$0xff]
    %v574 = vsel %vm183, %v305, 0
    %v577 = vsel %vm183, %v306, 0
    %v580 = vsel %vm183, %v307, 0
    %v583 = vsel %vm183, %v308, 0
    %v586 = vsel %vm183, %v309, 0
    %v589 = vsel %vm183, %v310, 0
    %v592 = vsel %vm183, %v311, 0
    %v595 = vsel %vm183, %v312, 0
    %597 = vmatprep.subr.mxu0 0.0
    %598 = vmatpush1.msra.mxu0 %v569
    %599 = vmatprep.subr.mxu0 0.0
    %600 = vmatpush1.msra.mxu0 %v570
    %601 = vmatprep.subr.mxu0 0.0
    %602 = vmatpush1.msra.mxu0 %v571
    %603 = vmatprep.subr.mxu0 0.0
    %604 = vmatpush1.msra.mxu0 %v572
    %605 = vmatprep.subr.mxu0 0.0
    %606 = vmatpush1.msra.mxu0 0.0
    %607 = vmatprep.subr.mxu0 0.0
    %608 = vmatpush1.msra.mxu0 0.0
    %609 = vmatprep.subr.mxu0 0.0
    %610 = vmatpush1.msra.mxu0 0.0
    %611 = vmatprep.subr.mxu0 0.0
    %612 = vmatpush1.msra.mxu0 0.0
    %613 = vmatprep.subr.mxu0 0.0
    %614 = vmatpush1.msra.mxu0 0.0
    %615 = vmatprep.subr.mxu0 0.0
    %616 = vmatpush1.msra.mxu0 0.0
    %617 = vmatprep.subr.mxu0 0.0
    %618 = vmatpush1.msra.mxu0 0.0
    %619 = vmatprep.subr.mxu0 0.0
    %620 = vmatpush1.msra.mxu0 0.0
    %621 = vmatprep.subr.mxu0 0.0
    %622 = vmatpush1.msra.mxu0 0.0
    %623 = vmatprep.subr.mxu0 0.0
    %624 = vmatpush1.msra.mxu0 0.0
    %625 = vmatprep.subr.mxu0 0.0
    %626 = vmatpush1.msra.mxu0 0.0
    %627 = vmatprep.subr.mxu0 0.0
    %628 = vmatpush1.msra.mxu0 0.0
    %629 = vmatprep.subr.mxu0 0.0
    %630 = vmatpush1.msra.mxu0 0.0
    %631 = vmatprep.subr.mxu0 0.0
    %632 = vmatpush1.msra.mxu0 0.0
    %633 = vmatprep.subr.mxu0 0.0
    %634 = vmatpush1.msra.mxu0 0.0
    %635 = vmatprep.subr.mxu0 0.0
    %636 = vmatpush1.msra.mxu0 0.0
    %637 = vmatprep.subr.mxu0 0.0
    %638 = vmatpush1.msra.mxu0 0.0
    %639 = vmatprep.subr.mxu0 0.0
    %640 = vmatpush1.msra.mxu0 0.0
    %641 = vmatprep.subr.mxu0 0.0
    %642 = vmatpush1.msra.mxu0 0.0
    %643 = vmatprep.subr.mxu0 0.0
    %644 = vmatpush1.msra.mxu0 0.0
    %645 = vmatprep.subr.mxu0 0.0
    %646 = vmatpush1.msra.mxu0 0.0
    %647 = vmatprep.subr.mxu0 0.0
    %648 = vmatpush1.msra.mxu0 0.0
    %649 = vmatprep.subr.mxu0 0.0
    %650 = vmatpush1.msra.mxu0 0.0
    %651 = vmatprep.subr.mxu0 0.0
    %652 = vmatpush1.msra.mxu0 0.0
    %653 = vmatprep.subr.mxu0 0.0
    %654 = vmatpush1.msra.mxu0 0.0
    %655 = vmatprep.subr.mxu0 0.0
    %656 = vmatpush1.msra.mxu0 0.0
    %657 = vmatprep.subr.mxu0 0.0
    %658 = vmatpush1.msra.mxu0 0.0
    %659 = vmatprep.subr.mxu0 0.0
    %660 = vmatpush1.msra.mxu0 0.0
    %661 = vmatprep.mubr.f32.mxu0 0.0
    %662 = vmatmul.mubr.f32.gmra.mrb[0].mxu0 %v574
    %v663 = vpop.f32.mrb[0].mxu0
    %v664 = vadd.f32 0.0, %v663
    %v665 = vpop.f32.mrb[0].mxu0
    %666 = vmatprep.mubr.f32.mxu0 0.0
    %667 = vmatmul.mubr.f32.gmra.mrb[0].mxu0 %v577
    %v668 = vpop.f32.mrb[0].mxu0
    %v669 = vadd.f32 0.0, %v668
    %v670 = vpop.f32.mrb[0].mxu0
    %671 = vmatprep.mubr.f32.mxu0 0.0
    %672 = vmatmul.mubr.f32.gmra.mrb[0].mxu0 %v580
    %v673 = vpop.f32.mrb[0].mxu0
    %v674 = vadd.f32 0.0, %v673
    %v675 = vpop.f32.mrb[0].mxu0
    %676 = vmatprep.mubr.f32.mxu0 0.0
    %677 = vmatmul.mubr.f32.gmra.mrb[0].mxu0 %v583
    %v678 = vpop.f32.mrb[0].mxu0
    %v679 = vadd.f32 0.0, %v678
    %v680 = vpop.f32.mrb[0].mxu0
    %681 = vmatprep.mubr.f32.mxu0 0.0
    %682 = vmatmul.mubr.f32.gmra.mrb[0].mxu0 %v586
    %v683 = vpop.f32.mrb[0].mxu0
    %v684 = vadd.f32 0.0, %v683
    %v685 = vpop.f32.mrb[0].mxu0
    %686 = vmatprep.mubr.f32.mxu0 0.0
    %687 = vmatmul.mubr.f32.gmra.mrb[0].mxu0 %v589
    %v688 = vpop.f32.mrb[0].mxu0
    %v689 = vadd.f32 0.0, %v688
    %v690 = vpop.f32.mrb[0].mxu0
    %691 = vmatprep.mubr.f32.mxu0 0.0
    %692 = vmatmul.mubr.f32.gmra.mrb[0].mxu0 %v592
    %v693 = vpop.f32.mrb[0].mxu0
    %v694 = vadd.f32 0.0, %v693
    %v695 = vpop.f32.mrb[0].mxu0
    %696 = vmatprep.mubr.f32.mxu0 0.0
    %697 = vmatmul.mubr.f32.gmra.mrb[0].mxu0 %v595
    %v698 = vpop.f32.mrb[0].mxu0
    %v699 = vadd.f32 0.0, %v698
    %v700 = vpop.f32.mrb[0].mxu0
    %701 = vdwg.mxu0
    %710 = vrot.lane.b32.xlu0 0.0, 32
    %v711 = vpop.permute.xlu0 %710
    %712 = vrot.lane.b32.xlu0 %v664, 32
    %v713 = vpop.permute.xlu0 %712
    %714 = vrot.lane.b32.xlu0 %v669, 32
    %v715 = vpop.permute.xlu0 %714
    %716 = vrot.lane.b32.xlu0 %v674, 32
    %v717 = vpop.permute.xlu0 %716
    %718 = vrot.lane.b32.xlu0 %v679, 32
    %v719 = vpop.permute.xlu0 %718
    %720 = vrot.lane.b32.xlu0 %v684, 32
    %v721 = vpop.permute.xlu0 %720
    %722 = vrot.lane.b32.xlu0 %v689, 32
    %v723 = vpop.permute.xlu0 %722
    %724 = vrot.lane.b32.xlu0 %v694, 32
    %v725 = vpop.permute.xlu0 %724
    %v734 = vadd.f32 %v664, %v711
    %v735 = vadd.f32 %v669, %v713
    %v736 = vadd.f32 %v674, %v715
    %v737 = vadd.f32 %v679, %v717
    %v738 = vadd.f32 %v684, %v719
    %v739 = vadd.f32 %v689, %v721
    %v740 = vadd.f32 %v694, %v723
    %v741 = vadd.f32 %v699, %v725
    %743 = vrot.lane.b32.xlu0 %v669, 96
    %v744 = vpop.permute.xlu0 %743
    %745 = vrot.lane.b32.xlu0 %v674, 96
    %v746 = vpop.permute.xlu0 %745
    %747 = vrot.lane.b32.xlu0 %v679, 96
    %v748 = vpop.permute.xlu0 %747
    %749 = vrot.lane.b32.xlu0 %v684, 96
    %v750 = vpop.permute.xlu0 %749
    %751 = vrot.lane.b32.xlu0 %v689, 96
    %v752 = vpop.permute.xlu0 %751
    %753 = vrot.lane.b32.xlu0 %v694, 96
    %v754 = vpop.permute.xlu0 %753
    %755 = vrot.lane.b32.xlu0 %v699, 96
    %v756 = vpop.permute.xlu0 %755
    %757 = vrot.lane.b32.xlu0 0.0, 96
    %v758 = vpop.permute.xlu0 %757
    %v767 = vadd.f32 %v734, %v744
    %v768 = vadd.f32 %v735, %v746
    %v769 = vadd.f32 %v736, %v748
    %v770 = vadd.f32 %v737, %v750
    %v771 = vadd.f32 %v738, %v752
    %v772 = vadd.f32 %v739, %v754
    %v773 = vadd.f32 %v740, %v756
    %v774 = vadd.f32 %v741, %v758
    %v775 = vlaneseq
    %v776 = vshrl.u32 %v775, 7
    %v777 = vsub.s32 3, %v776
    %v778 = vrot.slane %v37, %v777
    %780 = vrot.lane.b32.xlu0 %v778, 32
    %v781 = vpop.permute.xlu0 %780
    %v783 = vadd.f32 %v767, %v781
    %v784 = vadd.f32 %v768, %v781
    %v785 = vadd.f32 %v769, %v781
    %v786 = vadd.f32 %v770, %v781
    %v787 = vadd.f32 %v771, %v781
    %v788 = vadd.f32 %v772, %v781
    %v789 = vadd.f32 %v773, %v781
    %v790 = vadd.f32 %v774, %v781
    %799 = vrot.lane.b32.xlu0 %v783, 96
    %v800 = vpop.permute.xlu0 %799
    %801 = vrot.lane.b32.xlu0 %v784, 96
    %v802 = vpop.permute.xlu0 %801
    %803 = vrot.lane.b32.xlu0 %v785, 96
    %v804 = vpop.permute.xlu0 %803
    %805 = vrot.lane.b32.xlu0 %v786, 96
    %v806 = vpop.permute.xlu0 %805
    %807 = vrot.lane.b32.xlu0 %v787, 96
    %v808 = vpop.permute.xlu0 %807
    %809 = vrot.lane.b32.xlu0 %v788, 96
    %v810 = vpop.permute.xlu0 %809
    %811 = vrot.lane.b32.xlu0 %v789, 96
    %v812 = vpop.permute.xlu0 %811
    %813 = vrot.lane.b32.xlu0 %v790, 96
    %v814 = vpop.permute.xlu0 %813
    %v823 = vsel %vm183, %v800, 0.0
    %824 = vadd.xlane.f32.xlu0 %v823
    %v825 = vpop.xlane.xlu0 %824
    %v826 = vsel %vm183, %v802, 0.0
    %827 = vadd.xlane.f32.xlu0 %v826
    %v828 = vpop.xlane.xlu0 %827
    %v829 = vsel %vm183, %v804, 0.0
    %830 = vadd.xlane.f32.xlu0 %v829
    %v831 = vpop.xlane.xlu0 %830
    %v832 = vsel %vm183, %v806, 0.0
    %833 = vadd.xlane.f32.xlu0 %v832
    %v834 = vpop.xlane.xlu0 %833
    %v835 = vsel %vm183, %v808, 0.0
    %836 = vadd.xlane.f32.xlu0 %v835
    %v837 = vpop.xlane.xlu0 %836
    %v838 = vsel %vm183, %v810, 0.0
    %839 = vadd.xlane.f32.xlu0 %v838
    %v840 = vpop.xlane.xlu0 %839
    %v841 = vsel %vm183, %v812, 0.0
    %842 = vadd.xlane.f32.xlu0 %v841
    %v843 = vpop.xlane.xlu0 %842
    %v844 = vsel %vm183, %v814, 0.0
    %845 = vadd.xlane.f32.xlu0 %v844
    %v846 = vpop.xlane.xlu0 %845
    %v847 = vmul.f32 %v825, %v208
    %v848 = vmul.f32 %v828, %v208
    %v849 = vmul.f32 %v831, %v208
    %v850 = vmul.f32 %v834, %v208
    %v851 = vmul.f32 %v837, %v208
    %v852 = vmul.f32 %v840, %v208
    %v853 = vmul.f32 %v843, %v208
    %v854 = vmul.f32 %v846, %v208
    %v855 = vsub.f32 %v783, %v847
    %v856 = vsub.f32 %v784, %v848
    %v857 = vsub.f32 %v785, %v849
    %v858 = vsub.f32 %v786, %v850
    %v859 = vsub.f32 %v787, %v851
    %v860 = vsub.f32 %v788, %v852
    %v861 = vsub.f32 %v789, %v853
    %v862 = vsub.f32 %v790, %v854
    %v863 = vmul.f32 %v855, %v855
    %v864 = vmul.f32 %v856, %v856
    %v865 = vmul.f32 %v857, %v857
    %v866 = vmul.f32 %v858, %v858
    %v867 = vmul.f32 %v859, %v859
    %v868 = vmul.f32 %v860, %v860
    %v869 = vmul.f32 %v861, %v861
    %v870 = vmul.f32 %v862, %v862
    %879 = vrot.lane.b32.xlu0 %v863, 96
    %v880 = vpop.permute.xlu0 %879
    %881 = vrot.lane.b32.xlu0 %v864, 96
    %v882 = vpop.permute.xlu0 %881
    %883 = vrot.lane.b32.xlu0 %v865, 96
    %v884 = vpop.permute.xlu0 %883
    %885 = vrot.lane.b32.xlu0 %v866, 96
    %v886 = vpop.permute.xlu0 %885
    %887 = vrot.lane.b32.xlu0 %v867, 96
    %v888 = vpop.permute.xlu0 %887
    %889 = vrot.lane.b32.xlu0 %v868, 96
    %v890 = vpop.permute.xlu0 %889
    %891 = vrot.lane.b32.xlu0 %v869, 96
    %v892 = vpop.permute.xlu0 %891
    %893 = vrot.lane.b32.xlu0 %v870, 96
    %v894 = vpop.permute.xlu0 %893
    %v903 = vsel %vm183, %v880, 0.0
    %904 = vadd.xlane.f32.xlu0 %v903
    %v905 = vpop.xlane.xlu0 %904
    %v906 = vsel %vm183, %v882, 0.0
    %907 = vadd.xlane.f32.xlu0 %v906
    %v908 = vpop.xlane.xlu0 %907
    %v909 = vsel %vm183, %v884, 0.0
    %910 = vadd.xlane.f32.xlu0 %v909
    %v911 = vpop.xlane.xlu0 %910
    %v912 = vsel %vm183, %v886, 0.0
    %913 = vadd.xlane.f32.xlu0 %v912
    %v914 = vpop.xlane.xlu0 %913
    %v915 = vsel %vm183, %v888, 0.0
    %916 = vadd.xlane.f32.xlu0 %v915
    %v917 = vpop.xlane.xlu0 %916
    %v918 = vsel %vm183, %v890, 0.0
    %919 = vadd.xlane.f32.xlu0 %v918
    %v920 = vpop.xlane.xlu0 %919
    %v921 = vsel %vm183, %v892, 0.0
    %922 = vadd.xlane.f32.xlu0 %v921
    %v923 = vpop.xlane.xlu0 %922
    %v924 = vsel %vm183, %v894, 0.0
    %925 = vadd.xlane.f32.xlu0 %v924
    %v926 = vpop.xlane.xlu0 %925
    %v927 = vmul.f32 %v905, %v208
    %v928 = vmul.f32 %v908, %v208
    %v929 = vmul.f32 %v911, %v208
    %v930 = vmul.f32 %v914, %v208
    %v931 = vmul.f32 %v917, %v208
    %v932 = vmul.f32 %v920, %v208
    %v933 = vmul.f32 %v923, %v208
    %v934 = vmul.f32 %v926, %v208
    %v935 = vadd.f32 %v927, 1e-05
    %v936 = vadd.f32 %v928, 1e-05
    %v937 = vadd.f32 %v929, 1e-05
    %v938 = vadd.f32 %v930, 1e-05
    %v939 = vadd.f32 %v931, 1e-05
    %v940 = vadd.f32 %v932, 1e-05
    %v941 = vadd.f32 %v933, 1e-05
    %v942 = vadd.f32 %v934, 1e-05
    %v943 = vrsqrt.pop %v935
    %v944 = vrsqrt.pop %v936
    %v945 = vrsqrt.pop %v937
    %v946 = vrsqrt.pop %v938
    %v947 = vrsqrt.pop %v939
    %v948 = vrsqrt.pop %v940
    %v949 = vrsqrt.pop %v941
    %v950 = vrsqrt.pop %v942
    %v951 = vmul.f32 %v855, %v943
    %v952 = vmul.f32 %v856, %v944
    %v953 = vmul.f32 %v857, %v945
    %v954 = vmul.f32 %v858, %v946
    %v955 = vmul.f32 %v859, %v947
    %v956 = vmul.f32 %v860, %v948
    %v957 = vmul.f32 %v861, %v949
    %v958 = vmul.f32 %v862, %v950
    %v959 = vlaneseq
    %v960 = vshrl.u32 %v959, 7
    %v961 = vsub.s32 4, %v960
    %v962 = vrot.slane %v37, %v961
    %964 = vrot.lane.b32.xlu0 %v962, 32
    %v965 = vpop.permute.xlu0 %964
    %v967 = vmul.f32 %v951, %v965
    %v968 = vmul.f32 %v952, %v965
    %v969 = vmul.f32 %v953, %v965
    %v970 = vmul.f32 %v954, %v965
    %v971 = vmul.f32 %v955, %v965
    %v972 = vmul.f32 %v956, %v965
    %v973 = vmul.f32 %v957, %v965
    %v974 = vmul.f32 %v958, %v965
    %v975 = vlaneseq
    %v976 = vshrl.u32 %v975, 7
    %v977 = vsub.s32 5, %v976
    %v978 = vrot.slane %v37, %v977
    %980 = vrot.lane.b32.xlu0 %v978, 32
    %v981 = vpop.permute.xlu0 %980
    %v983 = vadd.f32 %v967, %v981
    %v984 = vadd.f32 %v968, %v981
    %v985 = vadd.f32 %v969, %v981
    %v986 = vadd.f32 %v970, %v981
    %v987 = vadd.f32 %v971, %v981
    %v988 = vadd.f32 %v972, %v981
    %v989 = vadd.f32 %v973, %v981
    %v990 = vadd.f32 %v974, %v981
    %v991 = vmul.f32 %v983, 0.5
    %v992 = vmul.f32 %v984, 0.5
    %v993 = vmul.f32 %v985, 0.5
    %v994 = vmul.f32 %v986, 0.5
    %v995 = vmul.f32 %v987, 0.5
    %v996 = vmul.f32 %v988, 0.5
    %v997 = vmul.f32 %v989, 0.5
    %v998 = vmul.f32 %v990, 0.5
    %v999 = vtanh.pop %v991
    %v1000 = vtanh.pop %v992
    %v1001 = vtanh.pop %v993
    %v1002 = vtanh.pop %v994
    %v1003 = vtanh.pop %v995
    %v1004 = vtanh.pop %v996
    %v1005 = vtanh.pop %v997
    %v1006 = vtanh.pop %v998
    %v1007 = vmul.f32 %v999, 0.5
    %v1008 = vmul.f32 %v1000, 0.5
    %v1009 = vmul.f32 %v1001, 0.5
    %v1010 = vmul.f32 %v1002, 0.5
    %v1011 = vmul.f32 %v1003, 0.5
    %v1012 = vmul.f32 %v1004, 0.5
    %v1013 = vmul.f32 %v1005, 0.5
    %v1014 = vmul.f32 %v1006, 0.5
    %v1015 = vadd.f32 %v1007, 0.5
    %v1016 = vadd.f32 %v1008, 0.5
    %v1017 = vadd.f32 %v1009, 0.5
    %v1018 = vadd.f32 %v1010, 0.5
    %v1019 = vadd.f32 %v1011, 0.5
    %v1020 = vadd.f32 %v1012, 0.5
    %v1021 = vadd.f32 %v1013, 0.5
    %v1022 = vadd.f32 %v1014, 0.5
    %v1023 = vmul.f32 %v983, %v1015
    %v1024 = vmul.f32 %v984, %v1016
    %v1025 = vmul.f32 %v985, %v1017
    %v1026 = vmul.f32 %v986, %v1018
    %v1027 = vmul.f32 %v987, %v1019
    %v1028 = vmul.f32 %v988, %v1020
    %v1029 = vmul.f32 %v989, %v1021
    %v1030 = vmul.f32 %v990, %v1022
    %v1031 = vld [vmem:[%s4] sm:$0xff]
    %v1032 = vld [vmem:[%s4 + $0x8] sm:$0xff]
    %v1033 = vld [vmem:[%s4 + $0x10] sm:$0xff]
    %v1034 = vld [vmem:[%s4 + $0x18] sm:$0xff]
    %v1035 = vlaneseq
    %v1036 = vshrl.u32 %v1035, 7
    %v1037 = vsub.s32 6, %v1036
    %v1038 = vrot.slane %v37, %v1037
    %1047 = vrot.lane.b32.xlu0 %v1023, 96
    %v1048 = vpop.permute.xlu0 %1047
    %1049 = vrot.lane.b32.xlu0 %v1024, 96
    %v1050 = vpop.permute.xlu0 %1049
    %1051 = vrot.lane.b32.xlu0 %v1025, 96
    %v1052 = vpop.permute.xlu0 %1051
    %1053 = vrot.lane.b32.xlu0 %v1026, 96
    %v1054 = vpop.permute.xlu0 %1053
    %1055 = vrot.lane.b32.xlu0 %v1027, 96
    %v1056 = vpop.permute.xlu0 %1055
    %1057 = vrot.lane.b32.xlu0 %v1028, 96
    %v1058 = vpop.permute.xlu0 %1057
    %1059 = vrot.lane.b32.xlu0 %v1029, 96
    %v1060 = vpop.permute.xlu0 %1059
    %1061 = vrot.lane.b32.xlu0 %v1030, 96
    %v1062 = vpop.permute.xlu0 %1061
    %v1063 = vsel %vm183, %v1048, 0
    %v1065 = vsel %vm183, %v1050, 0
    %v1067 = vsel %vm183, %v1052, 0
    %v1069 = vsel %vm183, %v1054, 0
    %v1071 = vsel %vm183, %v1056, 0
    %v1073 = vsel %vm183, %v1058, 0
    %v1075 = vsel %vm183, %v1060, 0
    %v1077 = vsel %vm183, %v1062, 0
    %1079 = vmatprep.subr.mxu0 0.0
    %1080 = vmatpush1.msra.mxu0 %v1031
    %1081 = vmatprep.subr.mxu0 0.0
    %1082 = vmatpush1.msra.mxu0 %v1032
    %1083 = vmatprep.subr.mxu0 0.0
    %1084 = vmatpush1.msra.mxu0 %v1033
    %1085 = vmatprep.subr.mxu0 0.0
    %1086 = vmatpush1.msra.mxu0 %v1034
    %1087 = vmatprep.subr.mxu0 0.0
    %1088 = vmatpush1.msra.mxu0 0.0
    %1089 = vmatprep.subr.mxu0 0.0
    %1090 = vmatpush1.msra.mxu0 0.0
    %1091 = vmatprep.subr.mxu0 0.0
    %1092 = vmatpush1.msra.mxu0 0.0
    %1093 = vmatprep.subr.mxu0 0.0
    %1094 = vmatpush1.msra.mxu0 0.0
    %1095 = vmatprep.subr.mxu0 0.0
    %1096 = vmatpush1.msra.mxu0 0.0
    %1097 = vmatprep.subr.mxu0 0.0
    %1098 = vmatpush1.msra.mxu0 0.0
    %1099 = vmatprep.subr.mxu0 0.0
    %1100 = vmatpush1.msra.mxu0 0.0
    %1101 = vmatprep.subr.mxu0 0.0
    %1102 = vmatpush1.msra.mxu0 0.0
    %1103 = vmatprep.subr.mxu0 0.0
    %1104 = vmatpush1.msra.mxu0 0.0
    %1105 = vmatprep.subr.mxu0 0.0
    %1106 = vmatpush1.msra.mxu0 0.0
    %1107 = vmatprep.subr.mxu0 0.0
    %1108 = vmatpush1.msra.mxu0 0.0
    %1109 = vmatprep.subr.mxu0 0.0
    %1110 = vmatpush1.msra.mxu0 0.0
    %1111 = vmatprep.subr.mxu0 0.0
    %1112 = vmatpush1.msra.mxu0 0.0
    %1113 = vmatprep.subr.mxu0 0.0
    %1114 = vmatpush1.msra.mxu0 0.0
    %1115 = vmatprep.subr.mxu0 0.0
    %1116 = vmatpush1.msra.mxu0 0.0
    %1117 = vmatprep.subr.mxu0 0.0
    %1118 = vmatpush1.msra.mxu0 0.0
    %1119 = vmatprep.subr.mxu0 0.0
    %1120 = vmatpush1.msra.mxu0 0.0
    %1121 = vmatprep.subr.mxu0 0.0
    %1122 = vmatpush1.msra.mxu0 0.0
    %1123 = vmatprep.subr.mxu0 0.0
    %1124 = vmatpush1.msra.mxu0 0.0
    %1125 = vmatprep.subr.mxu0 0.0
    %1126 = vmatpush1.msra.mxu0 0.0
    %1127 = vmatprep.subr.mxu0 0.0
    %1128 = vmatpush1.msra.mxu0 0.0
    %1129 = vmatprep.subr.mxu0 0.0
    %1130 = vmatpush1.msra.mxu0 0.0
    %1131 = vmatprep.subr.mxu0 0.0
    %1132 = vmatpush1.msra.mxu0 0.0
    %1133 = vmatprep.subr.mxu0 0.0
    %1134 = vmatpush1.msra.mxu0 0.0
    %1135 = vmatprep.subr.mxu0 0.0
    %1136 = vmatpush1.msra.mxu0 0.0
    %1137 = vmatprep.subr.mxu0 0.0
    %1138 = vmatpush1.msra.mxu0 0.0
    %1139 = vmatprep.subr.mxu0 0.0
    %1140 = vmatpush1.msra.mxu0 0.0
    %1141 = vmatprep.subr.mxu0 0.0
    %1142 = vmatpush1.msra.mxu0 0.0
    %1143 = vmatprep.mubr.f32.mxu0 0.0
    %1144 = vmatmul.mubr.f32.gmra.mrb[0].mxu0 %v1063
    %v1145 = vpop.f32.mrb[0].mxu0
    %v1146 = vadd.f32 %v1038, %v1145
    %v1147 = vpop.f32.mrb[0].mxu0
    %1148 = vmatprep.mubr.f32.mxu0 0.0
    %1149 = vmatmul.mubr.f32.gmra.mrb[0].mxu0 %v1065
    %v1150 = vpop.f32.mrb[0].mxu0
    %v1151 = vadd.f32 %v1038, %v1150
    %v1152 = vpop.f32.mrb[0].mxu0
    %1153 = vmatprep.mubr.f32.mxu0 0.0
    %1154 = vmatmul.mubr.f32.gmra.mrb[0].mxu0 %v1067
    %v1155 = vpop.f32.mrb[0].mxu0
    %v1156 = vadd.f32 %v1038, %v1155
    %v1157 = vpop.f32.mrb[0].mxu0
    %1158 = vmatprep.mubr.f32.mxu0 0.0
    %1159 = vmatmul.mubr.f32.gmra.mrb[0].mxu0 %v1069
    %v1160 = vpop.f32.mrb[0].mxu0
    %v1161 = vadd.f32 %v1038, %v1160
    %v1162 = vpop.f32.mrb[0].mxu0
    %1163 = vmatprep.mubr.f32.mxu0 0.0
    %1164 = vmatmul.mubr.f32.gmra.mrb[0].mxu0 %v1071
    %v1165 = vpop.f32.mrb[0].mxu0
    %v1166 = vadd.f32 %v1038, %v1165
    %v1167 = vpop.f32.mrb[0].mxu0
    %1168 = vmatprep.mubr.f32.mxu0 0.0
    %1169 = vmatmul.mubr.f32.gmra.mrb[0].mxu0 %v1073
    %v1170 = vpop.f32.mrb[0].mxu0
    %v1171 = vadd.f32 %v1038, %v1170
    %v1172 = vpop.f32.mrb[0].mxu0
    %1173 = vmatprep.mubr.f32.mxu0 0.0
    %1174 = vmatmul.mubr.f32.gmra.mrb[0].mxu0 %v1075
    %v1175 = vpop.f32.mrb[0].mxu0
    %v1176 = vadd.f32 %v1038, %v1175
    %v1177 = vpop.f32.mrb[0].mxu0
    %1178 = vmatprep.mubr.f32.mxu0 0.0
    %1179 = vmatmul.mubr.f32.gmra.mrb[0].mxu0 %v1077
    %v1180 = vpop.f32.mrb[0].mxu0
    %v1181 = vadd.f32 %v1038, %v1180
    %v1182 = vpop.f32.mrb[0].mxu0
    %1183 = vdwg.mxu0
    %v1184 = vld [vmem:[%s5] sm:$0xff]
    %v1185 = vld [vmem:[%s5 + $0x8] sm:$0xff]
    %v1186 = vld [vmem:[%s5 + $0x10] sm:$0xff]
    %v1187 = vld [vmem:[%s5 + $0x18] sm:$0xff]
    %v1188 = vsel %vm183, 0.0, 0
    %1190 = vmatprep.subr.mxu0 0.0
    %1191 = vmatpush1.msra.mxu0 %v1184
    %1192 = vmatprep.subr.mxu0 0.0
    %1193 = vmatpush1.msra.mxu0 %v1185
    %1194 = vmatprep.subr.mxu0 0.0
    %1195 = vmatpush1.msra.mxu0 %v1186
    %1196 = vmatprep.subr.mxu0 0.0
    %1197 = vmatpush1.msra.mxu0 %v1187
    %1198 = vmatprep.subr.mxu0 0.0
    %1199 = vmatpush1.msra.mxu0 0.0
    %1200 = vmatprep.subr.mxu0 0.0
    %1201 = vmatpush1.msra.mxu0 0.0
    %1202 = vmatprep.subr.mxu0 0.0
    %1203 = vmatpush1.msra.mxu0 0.0
    %1204 = vmatprep.subr.mxu0 0.0
    %1205 = vmatpush1.msra.mxu0 0.0
    %1206 = vmatprep.subr.mxu0 0.0
    %1207 = vmatpush1.msra.mxu0 0.0
    %1208 = vmatprep.subr.mxu0 0.0
    %1209 = vmatpush1.msra.mxu0 0.0
    %1210 = vmatprep.subr.mxu0 0.0
    %1211 = vmatpush1.msra.mxu0 0.0
    %1212 = vmatprep.subr.mxu0 0.0
    %1213 = vmatpush1.msra.mxu0 0.0
    %1214 = vmatprep.subr.mxu0 0.0
    %1215 = vmatpush1.msra.mxu0 0.0
    %1216 = vmatprep.subr.mxu0 0.0
    %1217 = vmatpush1.msra.mxu0 0.0
    %1218 = vmatprep.subr.mxu0 0.0
    %1219 = vmatpush1.msra.mxu0 0.0
    %1220 = vmatprep.subr.mxu0 0.0
    %1221 = vmatpush1.msra.mxu0 0.0
    %1222 = vmatprep.subr.mxu0 0.0
    %1223 = vmatpush1.msra.mxu0 0.0
    %1224 = vmatprep.subr.mxu0 0.0
    %1225 = vmatpush1.msra.mxu0 0.0
    %1226 = vmatprep.subr.mxu0 0.0
    %1227 = vmatpush1.msra.mxu0 0.0
    %1228 = vmatprep.subr.mxu0 0.0
    %1229 = vmatpush1.msra.mxu0 0.0
    %1230 = vmatprep.subr.mxu0 0.0
    %1231 = vmatpush1.msra.mxu0 0.0
    %1232 = vmatprep.subr.mxu0 0.0
    %1233 = vmatpush1.msra.mxu0 0.0
    %1234 = vmatprep.subr.mxu0 0.0
    %1235 = vmatpush1.msra.mxu0 0.0
    %1236 = vmatprep.subr.mxu0 0.0
    %1237 = vmatpush1.msra.mxu0 0.0
    %1238 = vmatprep.subr.mxu0 0.0
    %1239 = vmatpush1.msra.mxu0 0.0
    %1240 = vmatprep.subr.mxu0 0.0
    %1241 = vmatpush1.msra.mxu0 0.0
    %1242 = vmatprep.subr.mxu0 0.0
    %1243 = vmatpush1.msra.mxu0 0.0
    %1244 = vmatprep.subr.mxu0 0.0
    %1245 = vmatpush1.msra.mxu0 0.0
    %1246 = vmatprep.subr.mxu0 0.0
    %1247 = vmatpush1.msra.mxu0 0.0
    %1248 = vmatprep.subr.mxu0 0.0
    %1249 = vmatpush1.msra.mxu0 0.0
    %1250 = vmatprep.subr.mxu0 0.0
    %1251 = vmatpush1.msra.mxu0 0.0
    %1252 = vmatprep.subr.mxu0 0.0
    %1253 = vmatpush1.msra.mxu0 0.0
    %1254 = vmatprep.mubr.f32.mxu0 0.0
    %1255 = vmatmul.mubr.f32.gmra.mrb[0].mxu0 %v1188
    %v1256 = vpop.f32.mrb[0].mxu0
    %v1257 = vadd.f32 0.0, %v1256
    %v1258 = vpop.f32.mrb[0].mxu0
    %1259 = vdwg.mxu0
    %v1260 = vadd.f32 %v1146, %v1257
    %v1261 = vmul.f32 %v1260, 0.5
    %v1262 = vtanh.pop %v1261
    %v1263 = vmul.f32 %v1262, 0.5
    %v1264 = vadd.f32 %v1263, 0.5
    %v1265 = vlaneseq
    %v1266 = vshrl.u32 %v1265, 7
    %v1267 = vsub.s32 7, %v1266
    %v1268 = vrot.slane %v37, %v1267
    %1270 = vrot.lane.b32.xlu0 %v1268, 64
    %v1271 = vpop.permute.xlu0 %1270
    %v1273 = vadd.f32 %v1257, %v1271
    %1275 = vrot.lane.b32.xlu0 %v1273, 64
    %v1276 = vpop.permute.xlu0 %1275
    %v1278 = vmul.f32 %v1264, %v1276
    %1280 = vrot.lane.b32.xlu0 %v1278, 64
    %v1281 = vpop.permute.xlu0 %1280
    %v1283 = vadd.f32 %v1146, %v1281
    %v1284 = vtanh.pop %v1283
    %v1285 = vsub.f32 1.0, %v1264
    %1287 = vrot.lane.b32.xlu0 %v1284, 96
    %v1288 = vpop.permute.xlu0 %1287
    %v1290 = vmul.f32 %v1285, %v1288
    %v1291 = vmul.f32 %v1264, 0.0
    %v1292 = vadd.f32 %v1290, %v1291
    %1294 = vrot.lane.b32.xlu0 %v1292, 96
    %v1295 = vpop.permute.xlu0 %1294
    %1297 = vst.msk [vmem:[#allocation2] sm:$0xff] %vm183, %v1295
    %v1298 = vsel %vm183, %v1295, 0
    %1300 = vmatprep.subr.mxu0 0.0
    %1301 = vmatpush1.msra.mxu0 %v1184
    %1302 = vmatprep.subr.mxu0 0.0
    %1303 = vmatpush1.msra.mxu0 %v1185
    %1304 = vmatprep.subr.mxu0 0.0
    %1305 = vmatpush1.msra.mxu0 %v1186
    %1306 = vmatprep.subr.mxu0 0.0
    %1307 = vmatpush1.msra.mxu0 %v1187
    %1308 = vmatprep.subr.mxu0 0.0
    %1309 = vmatpush1.msra.mxu0 0.0
    %1310 = vmatprep.subr.mxu0 0.0
    %1311 = vmatpush1.msra.mxu0 0.0
    %1312 = vmatprep.subr.mxu0 0.0
    %1313 = vmatpush1.msra.mxu0 0.0
    %1314 = vmatprep.subr.mxu0 0.0
    %1315 = vmatpush1.msra.mxu0 0.0
    %1316 = vmatprep.subr.mxu0 0.0
    %1317 = vmatpush1.msra.mxu0 0.0
    %1318 = vmatprep.subr.mxu0 0.0
    %1319 = vmatpush1.msra.mxu0 0.0
    %1320 = vmatprep.subr.mxu0 0.0
    %1321 = vmatpush1.msra.mxu0 0.0
    %1322 = vmatprep.subr.mxu0 0.0
    %1323 = vmatpush1.msra.mxu0 0.0
    %1324 = vmatprep.subr.mxu0 0.0
    %1325 = vmatpush1.msra.mxu0 0.0
    %1326 = vmatprep.subr.mxu0 0.0
    %1327 = vmatpush1.msra.mxu0 0.0
    %1328 = vmatprep.subr.mxu0 0.0
    %1329 = vmatpush1.msra.mxu0 0.0
    %1330 = vmatprep.subr.mxu0 0.0
    %1331 = vmatpush1.msra.mxu0 0.0
    %1332 = vmatprep.subr.mxu0 0.0
    %1333 = vmatpush1.msra.mxu0 0.0
    %1334 = vmatprep.subr.mxu0 0.0
    %1335 = vmatpush1.msra.mxu0 0.0
    %1336 = vmatprep.subr.mxu0 0.0
    %1337 = vmatpush1.msra.mxu0 0.0
    %1338 = vmatprep.subr.mxu0 0.0
    %1339 = vmatpush1.msra.mxu0 0.0
    %1340 = vmatprep.subr.mxu0 0.0
    %1341 = vmatpush1.msra.mxu0 0.0
    %1342 = vmatprep.subr.mxu0 0.0
    %1343 = vmatpush1.msra.mxu0 0.0
    %1344 = vmatprep.subr.mxu0 0.0
    %1345 = vmatpush1.msra.mxu0 0.0
    %1346 = vmatprep.subr.mxu0 0.0
    %1347 = vmatpush1.msra.mxu0 0.0
    %1348 = vmatprep.subr.mxu0 0.0
    %1349 = vmatpush1.msra.mxu0 0.0
    %1350 = vmatprep.subr.mxu0 0.0
    %1351 = vmatpush1.msra.mxu0 0.0
    %1352 = vmatprep.subr.mxu0 0.0
    %1353 = vmatpush1.msra.mxu0 0.0
    %1354 = vmatprep.subr.mxu0 0.0
    %1355 = vmatpush1.msra.mxu0 0.0
    %1356 = vmatprep.subr.mxu0 0.0
    %1357 = vmatpush1.msra.mxu0 0.0
    %1358 = vmatprep.subr.mxu0 0.0
    %1359 = vmatpush1.msra.mxu0 0.0
    %1360 = vmatprep.subr.mxu0 0.0
    %1361 = vmatpush1.msra.mxu0 0.0
    %1362 = vmatprep.subr.mxu0 0.0
    %1363 = vmatpush1.msra.mxu0 0.0
    %1364 = vmatprep.mubr.f32.mxu0 0.0
    %1365 = vmatmul.mubr.f32.gmra.mrb[0].mxu0 %v1298
    %v1366 = vpop.f32.mrb[0].mxu0
    %v1367 = vadd.f32 0.0, %v1366
    %v1368 = vpop.f32.mrb[0].mxu0
    %1369 = vdwg.mxu0
    %v1370 = vadd.f32 %v1151, %v1367
    %v1371 = vmul.f32 %v1370, 0.5
    %v1372 = vtanh.pop %v1371
    %v1373 = vmul.f32 %v1372, 0.5
    %v1374 = vadd.f32 %v1373, 0.5
    %v1375 = vadd.f32 %v1367, %v1271
    %1377 = vrot.lane.b32.xlu0 %v1375, 64
    %v1378 = vpop.permute.xlu0 %1377
    %v1380 = vmul.f32 %v1374, %v1378
    %1382 = vrot.lane.b32.xlu0 %v1380, 64
    %v1383 = vpop.permute.xlu0 %1382
    %v1385 = vadd.f32 %v1151, %v1383
    %v1386 = vtanh.pop %v1385
    %v1387 = vsub.f32 1.0, %v1374
    %1389 = vrot.lane.b32.xlu0 %v1386, 96
    %v1390 = vpop.permute.xlu0 %1389
    %v1392 = vmul.f32 %v1387, %v1390
    %v1393 = vmul.f32 %v1374, %v1292
    %v1394 = vadd.f32 %v1392, %v1393
    %1396 = vrot.lane.b32.xlu0 %v1394, 96
    %v1397 = vpop.permute.xlu0 %1396
    %1399 = vst.msk [vmem:[#allocation2 + $0x8] sm:$0xff] %vm183, %v1397
    %v1400 = vsel %vm183, %v1397, 0
    %1402 = vmatprep.subr.mxu0 0.0
    %1403 = vmatpush1.msra.mxu0 %v1184
    %1404 = vmatprep.subr.mxu0 0.0
    %1405 = vmatpush1.msra.mxu0 %v1185
    %1406 = vmatprep.subr.mxu0 0.0
    %1407 = vmatpush1.msra.mxu0 %v1186
    %1408 = vmatprep.subr.mxu0 0.0
    %1409 = vmatpush1.msra.mxu0 %v1187
    %1410 = vmatprep.subr.mxu0 0.0
    %1411 = vmatpush1.msra.mxu0 0.0
    %1412 = vmatprep.subr.mxu0 0.0
    %1413 = vmatpush1.msra.mxu0 0.0
    %1414 = vmatprep.subr.mxu0 0.0
    %1415 = vmatpush1.msra.mxu0 0.0
    %1416 = vmatprep.subr.mxu0 0.0
    %1417 = vmatpush1.msra.mxu0 0.0
    %1418 = vmatprep.subr.mxu0 0.0
    %1419 = vmatpush1.msra.mxu0 0.0
    %1420 = vmatprep.subr.mxu0 0.0
    %1421 = vmatpush1.msra.mxu0 0.0
    %1422 = vmatprep.subr.mxu0 0.0
    %1423 = vmatpush1.msra.mxu0 0.0
    %1424 = vmatprep.subr.mxu0 0.0
    %1425 = vmatpush1.msra.mxu0 0.0
    %1426 = vmatprep.subr.mxu0 0.0
    %1427 = vmatpush1.msra.mxu0 0.0
    %1428 = vmatprep.subr.mxu0 0.0
    %1429 = vmatpush1.msra.mxu0 0.0
    %1430 = vmatprep.subr.mxu0 0.0
    %1431 = vmatpush1.msra.mxu0 0.0
    %1432 = vmatprep.subr.mxu0 0.0
    %1433 = vmatpush1.msra.mxu0 0.0
    %1434 = vmatprep.subr.mxu0 0.0
    %1435 = vmatpush1.msra.mxu0 0.0
    %1436 = vmatprep.subr.mxu0 0.0
    %1437 = vmatpush1.msra.mxu0 0.0
    %1438 = vmatprep.subr.mxu0 0.0
    %1439 = vmatpush1.msra.mxu0 0.0
    %1440 = vmatprep.subr.mxu0 0.0
    %1441 = vmatpush1.msra.mxu0 0.0
    %1442 = vmatprep.subr.mxu0 0.0
    %1443 = vmatpush1.msra.mxu0 0.0
    %1444 = vmatprep.subr.mxu0 0.0
    %1445 = vmatpush1.msra.mxu0 0.0
    %1446 = vmatprep.subr.mxu0 0.0
    %1447 = vmatpush1.msra.mxu0 0.0
    %1448 = vmatprep.subr.mxu0 0.0
    %1449 = vmatpush1.msra.mxu0 0.0
    %1450 = vmatprep.subr.mxu0 0.0
    %1451 = vmatpush1.msra.mxu0 0.0
    %1452 = vmatprep.subr.mxu0 0.0
    %1453 = vmatpush1.msra.mxu0 0.0
    %1454 = vmatprep.subr.mxu0 0.0
    %1455 = vmatpush1.msra.mxu0 0.0
    %1456 = vmatprep.subr.mxu0 0.0
    %1457 = vmatpush1.msra.mxu0 0.0
    %1458 = vmatprep.subr.mxu0 0.0
    %1459 = vmatpush1.msra.mxu0 0.0
    %1460 = vmatprep.subr.mxu0 0.0
    %1461 = vmatpush1.msra.mxu0 0.0
    %1462 = vmatprep.subr.mxu0 0.0
    %1463 = vmatpush1.msra.mxu0 0.0
    %1464 = vmatprep.subr.mxu0 0.0
    %1465 = vmatpush1.msra.mxu0 0.0
    %1466 = vmatprep.mubr.f32.mxu0 0.0
    %1467 = vmatmul.mubr.f32.gmra.mrb[0].mxu0 %v1400
    %v1468 = vpop.f32.mrb[0].mxu0
    %v1469 = vadd.f32 0.0, %v1468
    %v1470 = vpop.f32.mrb[0].mxu0
    %1471 = vdwg.mxu0
    %v1472 = vadd.f32 %v1156, %v1469
    %v1473 = vmul.f32 %v1472, 0.5
    %v1474 = vtanh.pop %v1473
    %v1475 = vmul.f32 %v1474, 0.5
    %v1476 = vadd.f32 %v1475, 0.5
    %v1477 = vadd.f32 %v1469, %v1271
    %1479 = vrot.lane.b32.xlu0 %v1477, 64
    %v1480 = vpop.permute.xlu0 %1479
    %v1482 = vmul.f32 %v1476, %v1480
    %1484 = vrot.lane.b32.xlu0 %v1482, 64
    %v1485 = vpop.permute.xlu0 %1484
    %v1487 = vadd.f32 %v1156, %v1485
    %v1488 = vtanh.pop %v1487
    %v1489 = vsub.f32 1.0, %v1476
    %1491 = vrot.lane.b32.xlu0 %v1488, 96
    %v1492 = vpop.permute.xlu0 %1491
    %v1494 = vmul.f32 %v1489, %v1492
    %v1495 = vmul.f32 %v1476, %v1394
    %v1496 = vadd.f32 %v1494, %v1495
    %1498 = vrot.lane.b32.xlu0 %v1496, 96
    %v1499 = vpop.permute.xlu0 %1498
    %1501 = vst.msk [vmem:[#allocation2 + $0x10] sm:$0xff] %vm183, %v1499
    %v1502 = vsel %vm183, %v1499, 0
    %1504 = vmatprep.subr.mxu0 0.0
    %1505 = vmatpush1.msra.mxu0 %v1184
    %1506 = vmatprep.subr.mxu0 0.0
    %1507 = vmatpush1.msra.mxu0 %v1185
    %1508 = vmatprep.subr.mxu0 0.0
    %1509 = vmatpush1.msra.mxu0 %v1186
    %1510 = vmatprep.subr.mxu0 0.0
    %1511 = vmatpush1.msra.mxu0 %v1187
    %1512 = vmatprep.subr.mxu0 0.0
    %1513 = vmatpush1.msra.mxu0 0.0
    %1514 = vmatprep.subr.mxu0 0.0
    %1515 = vmatpush1.msra.mxu0 0.0
    %1516 = vmatprep.subr.mxu0 0.0
    %1517 = vmatpush1.msra.mxu0 0.0
    %1518 = vmatprep.subr.mxu0 0.0
    %1519 = vmatpush1.msra.mxu0 0.0
    %1520 = vmatprep.subr.mxu0 0.0
    %1521 = vmatpush1.msra.mxu0 0.0
    %1522 = vmatprep.subr.mxu0 0.0
    %1523 = vmatpush1.msra.mxu0 0.0
    %1524 = vmatprep.subr.mxu0 0.0
    %1525 = vmatpush1.msra.mxu0 0.0
    %1526 = vmatprep.subr.mxu0 0.0
    %1527 = vmatpush1.msra.mxu0 0.0
    %1528 = vmatprep.subr.mxu0 0.0
    %1529 = vmatpush1.msra.mxu0 0.0
    %1530 = vmatprep.subr.mxu0 0.0
    %1531 = vmatpush1.msra.mxu0 0.0
    %1532 = vmatprep.subr.mxu0 0.0
    %1533 = vmatpush1.msra.mxu0 0.0
    %1534 = vmatprep.subr.mxu0 0.0
    %1535 = vmatpush1.msra.mxu0 0.0
    %1536 = vmatprep.subr.mxu0 0.0
    %1537 = vmatpush1.msra.mxu0 0.0
    %1538 = vmatprep.subr.mxu0 0.0
    %1539 = vmatpush1.msra.mxu0 0.0
    %1540 = vmatprep.subr.mxu0 0.0
    %1541 = vmatpush1.msra.mxu0 0.0
    %1542 = vmatprep.subr.mxu0 0.0
    %1543 = vmatpush1.msra.mxu0 0.0
    %1544 = vmatprep.subr.mxu0 0.0
    %1545 = vmatpush1.msra.mxu0 0.0
    %1546 = vmatprep.subr.mxu0 0.0
    %1547 = vmatpush1.msra.mxu0 0.0
    %1548 = vmatprep.subr.mxu0 0.0
    %1549 = vmatpush1.msra.mxu0 0.0
    %1550 = vmatprep.subr.mxu0 0.0
    %1551 = vmatpush1.msra.mxu0 0.0
    %1552 = vmatprep.subr.mxu0 0.0
    %1553 = vmatpush1.msra.mxu0 0.0
    %1554 = vmatprep.subr.mxu0 0.0
    %1555 = vmatpush1.msra.mxu0 0.0
    %1556 = vmatprep.subr.mxu0 0.0
    %1557 = vmatpush1.msra.mxu0 0.0
    %1558 = vmatprep.subr.mxu0 0.0
    %1559 = vmatpush1.msra.mxu0 0.0
    %1560 = vmatprep.subr.mxu0 0.0
    %1561 = vmatpush1.msra.mxu0 0.0
    %1562 = vmatprep.subr.mxu0 0.0
    %1563 = vmatpush1.msra.mxu0 0.0
    %1564 = vmatprep.subr.mxu0 0.0
    %1565 = vmatpush1.msra.mxu0 0.0
    %1566 = vmatprep.subr.mxu0 0.0
    %1567 = vmatpush1.msra.mxu0 0.0
    %1568 = vmatprep.mubr.f32.mxu0 0.0
    %1569 = vmatmul.mubr.f32.gmra.mrb[0].mxu0 %v1502
    %v1570 = vpop.f32.mrb[0].mxu0
    %v1571 = vadd.f32 0.0, %v1570
    %v1572 = vpop.f32.mrb[0].mxu0
    %1573 = vdwg.mxu0
    %v1574 = vadd.f32 %v1161, %v1571
    %v1575 = vmul.f32 %v1574, 0.5
    %v1576 = vtanh.pop %v1575
    %v1577 = vmul.f32 %v1576, 0.5
    %v1578 = vadd.f32 %v1577, 0.5
    %v1579 = vadd.f32 %v1571, %v1271
    %1581 = vrot.lane.b32.xlu0 %v1579, 64
    %v1582 = vpop.permute.xlu0 %1581
    %v1584 = vmul.f32 %v1578, %v1582
    %1586 = vrot.lane.b32.xlu0 %v1584, 64
    %v1587 = vpop.permute.xlu0 %1586
    %v1589 = vadd.f32 %v1161, %v1587
    %v1590 = vtanh.pop %v1589
    %v1591 = vsub.f32 1.0, %v1578
    %1593 = vrot.lane.b32.xlu0 %v1590, 96
    %v1594 = vpop.permute.xlu0 %1593
    %v1596 = vmul.f32 %v1591, %v1594
    %v1597 = vmul.f32 %v1578, %v1496
    %v1598 = vadd.f32 %v1596, %v1597
    %1600 = vrot.lane.b32.xlu0 %v1598, 96
    %v1601 = vpop.permute.xlu0 %1600
    %1603 = vst.msk [vmem:[#allocation2 + $0x18] sm:$0xff] %vm183, %v1601
    %v1604 = vsel %vm183, %v1601, 0
    %1606 = vmatprep.subr.mxu0 0.0
    %1607 = vmatpush1.msra.mxu0 %v1184
    %1608 = vmatprep.subr.mxu0 0.0
    %1609 = vmatpush1.msra.mxu0 %v1185
    %1610 = vmatprep.subr.mxu0 0.0
    %1611 = vmatpush1.msra.mxu0 %v1186
    %1612 = vmatprep.subr.mxu0 0.0
    %1613 = vmatpush1.msra.mxu0 %v1187
    %1614 = vmatprep.subr.mxu0 0.0
    %1615 = vmatpush1.msra.mxu0 0.0
    %1616 = vmatprep.subr.mxu0 0.0
    %1617 = vmatpush1.msra.mxu0 0.0
    %1618 = vmatprep.subr.mxu0 0.0
    %1619 = vmatpush1.msra.mxu0 0.0
    %1620 = vmatprep.subr.mxu0 0.0
    %1621 = vmatpush1.msra.mxu0 0.0
    %1622 = vmatprep.subr.mxu0 0.0
    %1623 = vmatpush1.msra.mxu0 0.0
    %1624 = vmatprep.subr.mxu0 0.0
    %1625 = vmatpush1.msra.mxu0 0.0
    %1626 = vmatprep.subr.mxu0 0.0
    %1627 = vmatpush1.msra.mxu0 0.0
    %1628 = vmatprep.subr.mxu0 0.0
    %1629 = vmatpush1.msra.mxu0 0.0
    %1630 = vmatprep.subr.mxu0 0.0
    %1631 = vmatpush1.msra.mxu0 0.0
    %1632 = vmatprep.subr.mxu0 0.0
    %1633 = vmatpush1.msra.mxu0 0.0
    %1634 = vmatprep.subr.mxu0 0.0
    %1635 = vmatpush1.msra.mxu0 0.0
    %1636 = vmatprep.subr.mxu0 0.0
    %1637 = vmatpush1.msra.mxu0 0.0
    %1638 = vmatprep.subr.mxu0 0.0
    %1639 = vmatpush1.msra.mxu0 0.0
    %1640 = vmatprep.subr.mxu0 0.0
    %1641 = vmatpush1.msra.mxu0 0.0
    %1642 = vmatprep.subr.mxu0 0.0
    %1643 = vmatpush1.msra.mxu0 0.0
    %1644 = vmatprep.subr.mxu0 0.0
    %1645 = vmatpush1.msra.mxu0 0.0
    %1646 = vmatprep.subr.mxu0 0.0
    %1647 = vmatpush1.msra.mxu0 0.0
    %1648 = vmatprep.subr.mxu0 0.0
    %1649 = vmatpush1.msra.mxu0 0.0
    %1650 = vmatprep.subr.mxu0 0.0
    %1651 = vmatpush1.msra.mxu0 0.0
    %1652 = vmatprep.subr.mxu0 0.0
    %1653 = vmatpush1.msra.mxu0 0.0
    %1654 = vmatprep.subr.mxu0 0.0
    %1655 = vmatpush1.msra.mxu0 0.0
    %1656 = vmatprep.subr.mxu0 0.0
    %1657 = vmatpush1.msra.mxu0 0.0
    %1658 = vmatprep.subr.mxu0 0.0
    %1659 = vmatpush1.msra.mxu0 0.0
    %1660 = vmatprep.subr.mxu0 0.0
    %1661 = vmatpush1.msra.mxu0 0.0
    %1662 = vmatprep.subr.mxu0 0.0
    %1663 = vmatpush1.msra.mxu0 0.0
    %1664 = vmatprep.subr.mxu0 0.0
    %1665 = vmatpush1.msra.mxu0 0.0
    %1666 = vmatprep.subr.mxu0 0.0
    %1667 = vmatpush1.msra.mxu0 0.0
    %1668 = vmatprep.subr.mxu0 0.0
    %1669 = vmatpush1.msra.mxu0 0.0
    %1670 = vmatprep.mubr.f32.mxu0 0.0
    %1671 = vmatmul.mubr.f32.gmra.mrb[0].mxu0 %v1604
    %v1672 = vpop.f32.mrb[0].mxu0
    %v1673 = vadd.f32 0.0, %v1672
    %v1674 = vpop.f32.mrb[0].mxu0
    %1675 = vdwg.mxu0
    %v1676 = vadd.f32 %v1166, %v1673
    %v1677 = vmul.f32 %v1676, 0.5
    %v1678 = vtanh.pop %v1677
    %v1679 = vmul.f32 %v1678, 0.5
    %v1680 = vadd.f32 %v1679, 0.5
    %v1681 = vadd.f32 %v1673, %v1271
    %1683 = vrot.lane.b32.xlu0 %v1681, 64
    %v1684 = vpop.permute.xlu0 %1683
    %v1686 = vmul.f32 %v1680, %v1684
    %1688 = vrot.lane.b32.xlu0 %v1686, 64
    %v1689 = vpop.permute.xlu0 %1688
    %v1691 = vadd.f32 %v1166, %v1689
    %v1692 = vtanh.pop %v1691
    %v1693 = vsub.f32 1.0, %v1680
    %1695 = vrot.lane.b32.xlu0 %v1692, 96
    %v1696 = vpop.permute.xlu0 %1695
    %v1698 = vmul.f32 %v1693, %v1696
    %v1699 = vmul.f32 %v1680, %v1598
    %v1700 = vadd.f32 %v1698, %v1699
    %1702 = vrot.lane.b32.xlu0 %v1700, 96
    %v1703 = vpop.permute.xlu0 %1702
    %1705 = vst.msk [vmem:[#allocation2 + $0x20] sm:$0xff] %vm183, %v1703
    %v1706 = vsel %vm183, %v1703, 0
    %1708 = vmatprep.subr.mxu0 0.0
    %1709 = vmatpush1.msra.mxu0 %v1184
    %1710 = vmatprep.subr.mxu0 0.0
    %1711 = vmatpush1.msra.mxu0 %v1185
    %1712 = vmatprep.subr.mxu0 0.0
    %1713 = vmatpush1.msra.mxu0 %v1186
    %1714 = vmatprep.subr.mxu0 0.0
    %1715 = vmatpush1.msra.mxu0 %v1187
    %1716 = vmatprep.subr.mxu0 0.0
    %1717 = vmatpush1.msra.mxu0 0.0
    %1718 = vmatprep.subr.mxu0 0.0
    %1719 = vmatpush1.msra.mxu0 0.0
    %1720 = vmatprep.subr.mxu0 0.0
    %1721 = vmatpush1.msra.mxu0 0.0
    %1722 = vmatprep.subr.mxu0 0.0
    %1723 = vmatpush1.msra.mxu0 0.0
    %1724 = vmatprep.subr.mxu0 0.0
    %1725 = vmatpush1.msra.mxu0 0.0
    %1726 = vmatprep.subr.mxu0 0.0
    %1727 = vmatpush1.msra.mxu0 0.0
    %1728 = vmatprep.subr.mxu0 0.0
    %1729 = vmatpush1.msra.mxu0 0.0
    %1730 = vmatprep.subr.mxu0 0.0
    %1731 = vmatpush1.msra.mxu0 0.0
    %1732 = vmatprep.subr.mxu0 0.0
    %1733 = vmatpush1.msra.mxu0 0.0
    %1734 = vmatprep.subr.mxu0 0.0
    %1735 = vmatpush1.msra.mxu0 0.0
    %1736 = vmatprep.subr.mxu0 0.0
    %1737 = vmatpush1.msra.mxu0 0.0
    %1738 = vmatprep.subr.mxu0 0.0
    %1739 = vmatpush1.msra.mxu0 0.0
    %1740 = vmatprep.subr.mxu0 0.0
    %1741 = vmatpush1.msra.mxu0 0.0
    %1742 = vmatprep.subr.mxu0 0.0
    %1743 = vmatpush1.msra.mxu0 0.0
    %1744 = vmatprep.subr.mxu0 0.0
    %1745 = vmatpush1.msra.mxu0 0.0
    %1746 = vmatprep.subr.mxu0 0.0
    %1747 = vmatpush1.msra.mxu0 0.0
    %1748 = vmatprep.subr.mxu0 0.0
    %1749 = vmatpush1.msra.mxu0 0.0
    %1750 = vmatprep.subr.mxu0 0.0
    %1751 = vmatpush1.msra.mxu0 0.0
    %1752 = vmatprep.subr.mxu0 0.0
    %1753 = vmatpush1.msra.mxu0 0.0
    %1754 = vmatprep.subr.mxu0 0.0
    %1755 = vmatpush1.msra.mxu0 0.0
    %1756 = vmatprep.subr.mxu0 0.0
    %1757 = vmatpush1.msra.mxu0 0.0
    %1758 = vmatprep.subr.mxu0 0.0
    %1759 = vmatpush1.msra.mxu0 0.0
    %1760 = vmatprep.subr.mxu0 0.0
    %1761 = vmatpush1.msra.mxu0 0.0
    %1762 = vmatprep.subr.mxu0 0.0
    %1763 = vmatpush1.msra.mxu0 0.0
    %1764 = vmatprep.subr.mxu0 0.0
    %1765 = vmatpush1.msra.mxu0 0.0
    %1766 = vmatprep.subr.mxu0 0.0
    %1767 = vmatpush1.msra.mxu0 0.0
    %1768 = vmatprep.subr.mxu0 0.0
    %1769 = vmatpush1.msra.mxu0 0.0
    %1770 = vmatprep.subr.mxu0 0.0
    %1771 = vmatpush1.msra.mxu0 0.0
    %1772 = vmatprep.mubr.f32.mxu0 0.0
    %1773 = vmatmul.mubr.f32.gmra.mrb[0].mxu0 %v1706
    %v1774 = vpop.f32.mrb[0].mxu0
    %v1775 = vadd.f32 0.0, %v1774
    %v1776 = vpop.f32.mrb[0].mxu0
    %1777 = vdwg.mxu0
    %v1778 = vadd.f32 %v1171, %v1775
    %v1779 = vmul.f32 %v1778, 0.5
    %v1780 = vtanh.pop %v1779
    %v1781 = vmul.f32 %v1780, 0.5
    %v1782 = vadd.f32 %v1781, 0.5
    %v1783 = vadd.f32 %v1775, %v1271
    %1785 = vrot.lane.b32.xlu0 %v1783, 64
    %v1786 = vpop.permute.xlu0 %1785
    %v1788 = vmul.f32 %v1782, %v1786
    %1790 = vrot.lane.b32.xlu0 %v1788, 64
    %v1791 = vpop.permute.xlu0 %1790
    %v1793 = vadd.f32 %v1171, %v1791
    %v1794 = vtanh.pop %v1793
    %v1795 = vsub.f32 1.0, %v1782
    %1797 = vrot.lane.b32.xlu0 %v1794, 96
    %v1798 = vpop.permute.xlu0 %1797
    %v1800 = vmul.f32 %v1795, %v1798
    %v1801 = vmul.f32 %v1782, %v1700
    %v1802 = vadd.f32 %v1800, %v1801
    %1804 = vrot.lane.b32.xlu0 %v1802, 96
    %v1805 = vpop.permute.xlu0 %1804
    %1807 = vst.msk [vmem:[#allocation2 + $0x28] sm:$0xff] %vm183, %v1805
    %v1808 = vsel %vm183, %v1805, 0
    %1810 = vmatprep.subr.mxu0 0.0
    %1811 = vmatpush1.msra.mxu0 %v1184
    %1812 = vmatprep.subr.mxu0 0.0
    %1813 = vmatpush1.msra.mxu0 %v1185
    %1814 = vmatprep.subr.mxu0 0.0
    %1815 = vmatpush1.msra.mxu0 %v1186
    %1816 = vmatprep.subr.mxu0 0.0
    %1817 = vmatpush1.msra.mxu0 %v1187
    %1818 = vmatprep.subr.mxu0 0.0
    %1819 = vmatpush1.msra.mxu0 0.0
    %1820 = vmatprep.subr.mxu0 0.0
    %1821 = vmatpush1.msra.mxu0 0.0
    %1822 = vmatprep.subr.mxu0 0.0
    %1823 = vmatpush1.msra.mxu0 0.0
    %1824 = vmatprep.subr.mxu0 0.0
    %1825 = vmatpush1.msra.mxu0 0.0
    %1826 = vmatprep.subr.mxu0 0.0
    %1827 = vmatpush1.msra.mxu0 0.0
    %1828 = vmatprep.subr.mxu0 0.0
    %1829 = vmatpush1.msra.mxu0 0.0
    %1830 = vmatprep.subr.mxu0 0.0
    %1831 = vmatpush1.msra.mxu0 0.0
    %1832 = vmatprep.subr.mxu0 0.0
    %1833 = vmatpush1.msra.mxu0 0.0
    %1834 = vmatprep.subr.mxu0 0.0
    %1835 = vmatpush1.msra.mxu0 0.0
    %1836 = vmatprep.subr.mxu0 0.0
    %1837 = vmatpush1.msra.mxu0 0.0
    %1838 = vmatprep.subr.mxu0 0.0
    %1839 = vmatpush1.msra.mxu0 0.0
    %1840 = vmatprep.subr.mxu0 0.0
    %1841 = vmatpush1.msra.mxu0 0.0
    %1842 = vmatprep.subr.mxu0 0.0
    %1843 = vmatpush1.msra.mxu0 0.0
    %1844 = vmatprep.subr.mxu0 0.0
    %1845 = vmatpush1.msra.mxu0 0.0
    %1846 = vmatprep.subr.mxu0 0.0
    %1847 = vmatpush1.msra.mxu0 0.0
    %1848 = vmatprep.subr.mxu0 0.0
    %1849 = vmatpush1.msra.mxu0 0.0
    %1850 = vmatprep.subr.mxu0 0.0
    %1851 = vmatpush1.msra.mxu0 0.0
    %1852 = vmatprep.subr.mxu0 0.0
    %1853 = vmatpush1.msra.mxu0 0.0
    %1854 = vmatprep.subr.mxu0 0.0
    %1855 = vmatpush1.msra.mxu0 0.0
    %1856 = vmatprep.subr.mxu0 0.0
    %1857 = vmatpush1.msra.mxu0 0.0
    %1858 = vmatprep.subr.mxu0 0.0
    %1859 = vmatpush1.msra.mxu0 0.0
    %1860 = vmatprep.subr.mxu0 0.0
    %1861 = vmatpush1.msra.mxu0 0.0
    %1862 = vmatprep.subr.mxu0 0.0
    %1863 = vmatpush1.msra.mxu0 0.0
    %1864 = vmatprep.subr.mxu0 0.0
    %1865 = vmatpush1.msra.mxu0 0.0
    %1866 = vmatprep.subr.mxu0 0.0
    %1867 = vmatpush1.msra.mxu0 0.0
    %1868 = vmatprep.subr.mxu0 0.0
    %1869 = vmatpush1.msra.mxu0 0.0
    %1870 = vmatprep.subr.mxu0 0.0
    %1871 = vmatpush1.msra.mxu0 0.0
    %1872 = vmatprep.subr.mxu0 0.0
    %1873 = vmatpush1.msra.mxu0 0.0
    %1874 = vmatprep.mubr.f32.mxu0 0.0
    %1875 = vmatmul.mubr.f32.gmra.mrb[0].mxu0 %v1808
    %v1876 = vpop.f32.mrb[0].mxu0
    %v1877 = vadd.f32 0.0, %v1876
    %v1878 = vpop.f32.mrb[0].mxu0
    %1879 = vdwg.mxu0
    %v1880 = vadd.f32 %v1176, %v1877
    %v1881 = vmul.f32 %v1880, 0.5
    %v1882 = vtanh.pop %v1881
    %v1883 = vmul.f32 %v1882, 0.5
    %v1884 = vadd.f32 %v1883, 0.5
    %v1885 = vadd.f32 %v1877, %v1271
    %1887 = vrot.lane.b32.xlu0 %v1885, 64
    %v1888 = vpop.permute.xlu0 %1887
    %v1890 = vmul.f32 %v1884, %v1888
    %1892 = vrot.lane.b32.xlu0 %v1890, 64
    %v1893 = vpop.permute.xlu0 %1892
    %v1895 = vadd.f32 %v1176, %v1893
    %v1896 = vtanh.pop %v1895
    %v1897 = vsub.f32 1.0, %v1884
    %1899 = vrot.lane.b32.xlu0 %v1896, 96
    %v1900 = vpop.permute.xlu0 %1899
    %v1902 = vmul.f32 %v1897, %v1900
    %v1903 = vmul.f32 %v1884, %v1802
    %v1904 = vadd.f32 %v1902, %v1903
    %1906 = vrot.lane.b32.xlu0 %v1904, 96
    %v1907 = vpop.permute.xlu0 %1906
    %1909 = vst.msk [vmem:[#allocation2 + $0x30] sm:$0xff] %vm183, %v1907
    %v1910 = vsel %vm183, %v1907, 0
    %1912 = vmatprep.subr.mxu0 0.0
    %1913 = vmatpush1.msra.mxu0 %v1184
    %1914 = vmatprep.subr.mxu0 0.0
    %1915 = vmatpush1.msra.mxu0 %v1185
    %1916 = vmatprep.subr.mxu0 0.0
    %1917 = vmatpush1.msra.mxu0 %v1186
    %1918 = vmatprep.subr.mxu0 0.0
    %1919 = vmatpush1.msra.mxu0 %v1187
    %1920 = vmatprep.subr.mxu0 0.0
    %1921 = vmatpush1.msra.mxu0 0.0
    %1922 = vmatprep.subr.mxu0 0.0
    %1923 = vmatpush1.msra.mxu0 0.0
    %1924 = vmatprep.subr.mxu0 0.0
    %1925 = vmatpush1.msra.mxu0 0.0
    %1926 = vmatprep.subr.mxu0 0.0
    %1927 = vmatpush1.msra.mxu0 0.0
    %1928 = vmatprep.subr.mxu0 0.0
    %1929 = vmatpush1.msra.mxu0 0.0
    %1930 = vmatprep.subr.mxu0 0.0
    %1931 = vmatpush1.msra.mxu0 0.0
    %1932 = vmatprep.subr.mxu0 0.0
    %1933 = vmatpush1.msra.mxu0 0.0
    %1934 = vmatprep.subr.mxu0 0.0
    %1935 = vmatpush1.msra.mxu0 0.0
    %1936 = vmatprep.subr.mxu0 0.0
    %1937 = vmatpush1.msra.mxu0 0.0
    %1938 = vmatprep.subr.mxu0 0.0
    %1939 = vmatpush1.msra.mxu0 0.0
    %1940 = vmatprep.subr.mxu0 0.0
    %1941 = vmatpush1.msra.mxu0 0.0
    %1942 = vmatprep.subr.mxu0 0.0
    %1943 = vmatpush1.msra.mxu0 0.0
    %1944 = vmatprep.subr.mxu0 0.0
    %1945 = vmatpush1.msra.mxu0 0.0
    %1946 = vmatprep.subr.mxu0 0.0
    %1947 = vmatpush1.msra.mxu0 0.0
    %1948 = vmatprep.subr.mxu0 0.0
    %1949 = vmatpush1.msra.mxu0 0.0
    %1950 = vmatprep.subr.mxu0 0.0
    %1951 = vmatpush1.msra.mxu0 0.0
    %1952 = vmatprep.subr.mxu0 0.0
    %1953 = vmatpush1.msra.mxu0 0.0
    %1954 = vmatprep.subr.mxu0 0.0
    %1955 = vmatpush1.msra.mxu0 0.0
    %1956 = vmatprep.subr.mxu0 0.0
    %1957 = vmatpush1.msra.mxu0 0.0
    %1958 = vmatprep.subr.mxu0 0.0
    %1959 = vmatpush1.msra.mxu0 0.0
    %1960 = vmatprep.subr.mxu0 0.0
    %1961 = vmatpush1.msra.mxu0 0.0
    %1962 = vmatprep.subr.mxu0 0.0
    %1963 = vmatpush1.msra.mxu0 0.0
    %1964 = vmatprep.subr.mxu0 0.0
    %1965 = vmatpush1.msra.mxu0 0.0
    %1966 = vmatprep.subr.mxu0 0.0
    %1967 = vmatpush1.msra.mxu0 0.0
    %1968 = vmatprep.subr.mxu0 0.0
    %1969 = vmatpush1.msra.mxu0 0.0
    %1970 = vmatprep.subr.mxu0 0.0
    %1971 = vmatpush1.msra.mxu0 0.0
    %1972 = vmatprep.subr.mxu0 0.0
    %1973 = vmatpush1.msra.mxu0 0.0
    %1974 = vmatprep.subr.mxu0 0.0
    %1975 = vmatpush1.msra.mxu0 0.0
    %1976 = vmatprep.mubr.f32.mxu0 0.0
    %1977 = vmatmul.mubr.f32.gmra.mrb[0].mxu0 %v1910
    %v1978 = vpop.f32.mrb[0].mxu0
    %v1979 = vadd.f32 0.0, %v1978
    %v1980 = vpop.f32.mrb[0].mxu0
    %1981 = vdwg.mxu0
    %v1982 = vadd.f32 %v1181, %v1979
    %v1983 = vmul.f32 %v1982, 0.5
    %v1984 = vtanh.pop %v1983
    %v1985 = vmul.f32 %v1984, 0.5
    %v1986 = vadd.f32 %v1985, 0.5
    %v1987 = vadd.f32 %v1979, %v1271
    %1989 = vrot.lane.b32.xlu0 %v1987, 64
    %v1990 = vpop.permute.xlu0 %1989
    %v1992 = vmul.f32 %v1986, %v1990
    %1994 = vrot.lane.b32.xlu0 %v1992, 64
    %v1995 = vpop.permute.xlu0 %1994
    %v1997 = vadd.f32 %v1181, %v1995
    %v1998 = vtanh.pop %v1997
    %v1999 = vsub.f32 1.0, %v1986
    %2001 = vrot.lane.b32.xlu0 %v1998, 96
    %v2002 = vpop.permute.xlu0 %2001
    %v2004 = vmul.f32 %v1999, %v2002
    %v2005 = vmul.f32 %v1986, %v1904
    %v2006 = vadd.f32 %v2004, %v2005
    %2008 = vrot.lane.b32.xlu0 %v2006, 96
    %v2009 = vpop.permute.xlu0 %2008
    %2011 = vst.msk [vmem:[#allocation2 + $0x38] sm:$0xff] %vm183, %v2009
    %2012 = vst.msk [vmem:[#allocation3] sm:$0xff] %vm183, %v2009
    %v2013 = vld [vmem:[#allocation2] sm:$0xff]
    %v2014 = vld [vmem:[#allocation2 + $0x8] sm:$0xff]
    %v2015 = vld [vmem:[#allocation2 + $0x10] sm:$0xff]
    %v2016 = vld [vmem:[#allocation2 + $0x18] sm:$0xff]
    %v2017 = vld [vmem:[#allocation2 + $0x20] sm:$0xff]
    %v2018 = vld [vmem:[#allocation2 + $0x28] sm:$0xff]
    %v2019 = vld [vmem:[#allocation2 + $0x30] sm:$0xff]
    %v2020 = vld [vmem:[#allocation2 + $0x38] sm:$0xff]
    %v2021 = vsel %vm183, %v2013, 0.0
    %2022 = vadd.xlane.f32.xlu0 %v2021
    %v2023 = vpop.xlane.xlu0 %2022
    %v2024 = vsel %vm183, %v2014, 0.0
    %2025 = vadd.xlane.f32.xlu0 %v2024
    %v2026 = vpop.xlane.xlu0 %2025
    %v2027 = vsel %vm183, %v2015, 0.0
    %2028 = vadd.xlane.f32.xlu0 %v2027
    %v2029 = vpop.xlane.xlu0 %2028
    %v2030 = vsel %vm183, %v2016, 0.0
    %2031 = vadd.xlane.f32.xlu0 %v2030
    %v2032 = vpop.xlane.xlu0 %2031
    %v2033 = vsel %vm183, %v2017, 0.0
    %2034 = vadd.xlane.f32.xlu0 %v2033
    %v2035 = vpop.xlane.xlu0 %2034
    %v2036 = vsel %vm183, %v2018, 0.0
    %2037 = vadd.xlane.f32.xlu0 %v2036
    %v2038 = vpop.xlane.xlu0 %2037
    %v2039 = vsel %vm183, %v2019, 0.0
    %2040 = vadd.xlane.f32.xlu0 %v2039
    %v2041 = vpop.xlane.xlu0 %2040
    %v2042 = vsel %vm183, %v2020, 0.0
    %2043 = vadd.xlane.f32.xlu0 %v2042
    %v2044 = vpop.xlane.xlu0 %2043
    %v2045 = vmul.f32 %v2023, %v208
    %v2046 = vmul.f32 %v2026, %v208
    %v2047 = vmul.f32 %v2029, %v208
    %v2048 = vmul.f32 %v2032, %v208
    %v2049 = vmul.f32 %v2035, %v208
    %v2050 = vmul.f32 %v2038, %v208
    %v2051 = vmul.f32 %v2041, %v208
    %v2052 = vmul.f32 %v2044, %v208
    %v2053 = vsub.f32 %v2013, %v2045
    %v2054 = vsub.f32 %v2014, %v2046
    %v2055 = vsub.f32 %v2015, %v2047
    %v2056 = vsub.f32 %v2016, %v2048
    %v2057 = vsub.f32 %v2017, %v2049
    %v2058 = vsub.f32 %v2018, %v2050
    %v2059 = vsub.f32 %v2019, %v2051
    %v2060 = vsub.f32 %v2020, %v2052
    %v2061 = vmul.f32 %v2053, %v2053
    %v2062 = vmul.f32 %v2054, %v2054
    %v2063 = vmul.f32 %v2055, %v2055
    %v2064 = vmul.f32 %v2056, %v2056
    %v2065 = vmul.f32 %v2057, %v2057
    %v2066 = vmul.f32 %v2058, %v2058
    %v2067 = vmul.f32 %v2059, %v2059
    %v2068 = vmul.f32 %v2060, %v2060
    %v2069 = vsel %vm183, %v2061, 0.0
    %2070 = vadd.xlane.f32.xlu0 %v2069
    %v2071 = vpop.xlane.xlu0 %2070
    %v2072 = vsel %vm183, %v2062, 0.0
    %2073 = vadd.xlane.f32.xlu0 %v2072
    %v2074 = vpop.xlane.xlu0 %2073
    %v2075 = vsel %vm183, %v2063, 0.0
    %2076 = vadd.xlane.f32.xlu0 %v2075
    %v2077 = vpop.xlane.xlu0 %2076
    %v2078 = vsel %vm183, %v2064, 0.0
    %2079 = vadd.xlane.f32.xlu0 %v2078
    %v2080 = vpop.xlane.xlu0 %2079
    %v2081 = vsel %vm183, %v2065, 0.0
    %2082 = vadd.xlane.f32.xlu0 %v2081
    %v2083 = vpop.xlane.xlu0 %2082
    %v2084 = vsel %vm183, %v2066, 0.0
    %2085 = vadd.xlane.f32.xlu0 %v2084
    %v2086 = vpop.xlane.xlu0 %2085
    %v2087 = vsel %vm183, %v2067, 0.0
    %2088 = vadd.xlane.f32.xlu0 %v2087
    %v2089 = vpop.xlane.xlu0 %2088
    %v2090 = vsel %vm183, %v2068, 0.0
    %2091 = vadd.xlane.f32.xlu0 %v2090
    %v2092 = vpop.xlane.xlu0 %2091
    %v2093 = vmul.f32 %v2071, %v208
    %v2094 = vmul.f32 %v2074, %v208
    %v2095 = vmul.f32 %v2077, %v208
    %v2096 = vmul.f32 %v2080, %v208
    %v2097 = vmul.f32 %v2083, %v208
    %v2098 = vmul.f32 %v2086, %v208
    %v2099 = vmul.f32 %v2089, %v208
    %v2100 = vmul.f32 %v2092, %v208
    %v2101 = vadd.f32 %v2093, 1e-05
    %v2102 = vadd.f32 %v2094, 1e-05
    %v2103 = vadd.f32 %v2095, 1e-05
    %v2104 = vadd.f32 %v2096, 1e-05
    %v2105 = vadd.f32 %v2097, 1e-05
    %v2106 = vadd.f32 %v2098, 1e-05
    %v2107 = vadd.f32 %v2099, 1e-05
    %v2108 = vadd.f32 %v2100, 1e-05
    %v2109 = vrsqrt.pop %v2101
    %v2110 = vrsqrt.pop %v2102
    %v2111 = vrsqrt.pop %v2103
    %v2112 = vrsqrt.pop %v2104
    %v2113 = vrsqrt.pop %v2105
    %v2114 = vrsqrt.pop %v2106
    %v2115 = vrsqrt.pop %v2107
    %v2116 = vrsqrt.pop %v2108
    %v2117 = vmul.f32 %v2053, %v2109
    %v2118 = vmul.f32 %v2054, %v2110
    %v2119 = vmul.f32 %v2055, %v2111
    %v2120 = vmul.f32 %v2056, %v2112
    %v2121 = vmul.f32 %v2057, %v2113
    %v2122 = vmul.f32 %v2058, %v2114
    %v2123 = vmul.f32 %v2059, %v2115
    %v2124 = vmul.f32 %v2060, %v2116
    %v2125 = vlaneseq
    %v2126 = vshrl.u32 %v2125, 7
    %v2127 = vsub.s32 0, %v2126
    %v2128 = vrot.slane %v38, %v2127
    %v2129 = vmul.f32 %v2117, %v2128
    %v2130 = vmul.f32 %v2118, %v2128
    %v2131 = vmul.f32 %v2119, %v2128
    %v2132 = vmul.f32 %v2120, %v2128
    %v2133 = vmul.f32 %v2121, %v2128
    %v2134 = vmul.f32 %v2122, %v2128
    %v2135 = vmul.f32 %v2123, %v2128
    %v2136 = vmul.f32 %v2124, %v2128
    %v2137 = vlaneseq
    %v2138 = vshrl.u32 %v2137, 7
    %v2139 = vsub.s32 1, %v2138
    %v2140 = vrot.slane %v38, %v2139
    %v2141 = vadd.f32 %v2129, %v2140
    %v2142 = vadd.f32 %v2130, %v2140
    %v2143 = vadd.f32 %v2131, %v2140
    %v2144 = vadd.f32 %v2132, %v2140
    %v2145 = vadd.f32 %v2133, %v2140
    %v2146 = vadd.f32 %v2134, %v2140
    %v2147 = vadd.f32 %v2135, %v2140
    %v2148 = vadd.f32 %v2136, %v2140
    %2157 = vrot.lane.b32.xlu0 %v561, 96
    %v2158 = vpop.permute.xlu0 %2157
    %2159 = vrot.lane.b32.xlu0 %v562, 96
    %v2160 = vpop.permute.xlu0 %2159
    %2161 = vrot.lane.b32.xlu0 %v563, 96
    %v2162 = vpop.permute.xlu0 %2161
    %2163 = vrot.lane.b32.xlu0 %v564, 96
    %v2164 = vpop.permute.xlu0 %2163
    %2165 = vrot.lane.b32.xlu0 %v565, 96
    %v2166 = vpop.permute.xlu0 %2165
    %2167 = vrot.lane.b32.xlu0 %v566, 96
    %v2168 = vpop.permute.xlu0 %2167
    %2169 = vrot.lane.b32.xlu0 %v567, 96
    %v2170 = vpop.permute.xlu0 %2169
    %2171 = vrot.lane.b32.xlu0 %v568, 96
    %v2172 = vpop.permute.xlu0 %2171
    %v2181 = vmul.f32 %v2141, %v2158
    %v2182 = vmul.f32 %v2142, %v2160
    %v2183 = vmul.f32 %v2143, %v2162
    %v2184 = vmul.f32 %v2144, %v2164
    %v2185 = vmul.f32 %v2145, %v2166
    %v2186 = vmul.f32 %v2146, %v2168
    %v2187 = vmul.f32 %v2147, %v2170
    %v2188 = vmul.f32 %v2148, %v2172
    %v2189 = vld [vmem:[%s6] sm:$0xff]
    %v2190 = vld [vmem:[%s6 + $0x8] sm:$0xff]
    %v2191 = vld [vmem:[%s6 + $0x10] sm:$0xff]
    %v2192 = vld [vmem:[%s6 + $0x18] sm:$0xff]
    %v2193 = vlaneseq
    %v2194 = vshrl.u32 %v2193, 7
    %v2195 = vsub.s32 5, %v2194
    %v2196 = vrot.slane %v38, %v2195
    %v2198 = vsel %vm183, %v2181, 0
    %v2201 = vsel %vm183, %v2182, 0
    %v2204 = vsel %vm183, %v2183, 0
    %v2207 = vsel %vm183, %v2184, 0
    %v2210 = vsel %vm183, %v2185, 0
    %v2213 = vsel %vm183, %v2186, 0
    %v2216 = vsel %vm183, %v2187, 0
    %v2219 = vsel %vm183, %v2188, 0
    %2221 = vmatprep.subr.mxu0 0.0
    %2222 = vmatpush1.msra.mxu0 %v2189
    %2223 = vmatprep.subr.mxu0 0.0
    %2224 = vmatpush1.msra.mxu0 %v2190
    %2225 = vmatprep.subr.mxu0 0.0
    %2226 = vmatpush1.msra.mxu0 %v2191
    %2227 = vmatprep.subr.mxu0 0.0
    %2228 = vmatpush1.msra.mxu0 %v2192
    %2229 = vmatprep.subr.mxu0 0.0
    %2230 = vmatpush1.msra.mxu0 0.0
    %2231 = vmatprep.subr.mxu0 0.0
    %2232 = vmatpush1.msra.mxu0 0.0
    %2233 = vmatprep.subr.mxu0 0.0
    %2234 = vmatpush1.msra.mxu0 0.0
    %2235 = vmatprep.subr.mxu0 0.0
    %2236 = vmatpush1.msra.mxu0 0.0
    %2237 = vmatprep.subr.mxu0 0.0
    %2238 = vmatpush1.msra.mxu0 0.0
    %2239 = vmatprep.subr.mxu0 0.0
    %2240 = vmatpush1.msra.mxu0 0.0
    %2241 = vmatprep.subr.mxu0 0.0
    %2242 = vmatpush1.msra.mxu0 0.0
    %2243 = vmatprep.subr.mxu0 0.0
    %2244 = vmatpush1.msra.mxu0 0.0
    %2245 = vmatprep.subr.mxu0 0.0
    %2246 = vmatpush1.msra.mxu0 0.0
    %2247 = vmatprep.subr.mxu0 0.0
    %2248 = vmatpush1.msra.mxu0 0.0
    %2249 = vmatprep.subr.mxu0 0.0
    %2250 = vmatpush1.msra.mxu0 0.0
    %2251 = vmatprep.subr.mxu0 0.0
    %2252 = vmatpush1.msra.mxu0 0.0
    %2253 = vmatprep.subr.mxu0 0.0
    %2254 = vmatpush1.msra.mxu0 0.0
    %2255 = vmatprep.subr.mxu0 0.0
    %2256 = vmatpush1.msra.mxu0 0.0
    %2257 = vmatprep.subr.mxu0 0.0
    %2258 = vmatpush1.msra.mxu0 0.0
    %2259 = vmatprep.subr.mxu0 0.0
    %2260 = vmatpush1.msra.mxu0 0.0
    %2261 = vmatprep.subr.mxu0 0.0
    %2262 = vmatpush1.msra.mxu0 0.0
    %2263 = vmatprep.subr.mxu0 0.0
    %2264 = vmatpush1.msra.mxu0 0.0
    %2265 = vmatprep.subr.mxu0 0.0
    %2266 = vmatpush1.msra.mxu0 0.0
    %2267 = vmatprep.subr.mxu0 0.0
    %2268 = vmatpush1.msra.mxu0 0.0
    %2269 = vmatprep.subr.mxu0 0.0
    %2270 = vmatpush1.msra.mxu0 0.0
    %2271 = vmatprep.subr.mxu0 0.0
    %2272 = vmatpush1.msra.mxu0 0.0
    %2273 = vmatprep.subr.mxu0 0.0
    %2274 = vmatpush1.msra.mxu0 0.0
    %2275 = vmatprep.subr.mxu0 0.0
    %2276 = vmatpush1.msra.mxu0 0.0
    %2277 = vmatprep.subr.mxu0 0.0
    %2278 = vmatpush1.msra.mxu0 0.0
    %2279 = vmatprep.subr.mxu0 0.0
    %2280 = vmatpush1.msra.mxu0 0.0
    %2281 = vmatprep.subr.mxu0 0.0
    %2282 = vmatpush1.msra.mxu0 0.0
    %2283 = vmatprep.subr.mxu0 0.0
    %2284 = vmatpush1.msra.mxu0 0.0
    %2285 = vmatprep.mubr.f32.mxu0 0.0
    %2286 = vmatmul.mubr.f32.gmra.mrb[0].mxu0 %v2198
    %v2287 = vpop.f32.mrb[0].mxu0
    %v2288 = vadd.f32 %v2196, %v2287
    %v2289 = vpop.f32.mrb[0].mxu0
    %2290 = vmatprep.mubr.f32.mxu0 0.0
    %2291 = vmatmul.mubr.f32.gmra.mrb[0].mxu0 %v2201
    %v2292 = vpop.f32.mrb[0].mxu0
    %v2293 = vadd.f32 %v2196, %v2292
    %v2294 = vpop.f32.mrb[0].mxu0
    %2295 = vmatprep.mubr.f32.mxu0 0.0
    %2296 = vmatmul.mubr.f32.gmra.mrb[0].mxu0 %v2204
    %v2297 = vpop.f32.mrb[0].mxu0
    %v2298 = vadd.f32 %v2196, %v2297
    %v2299 = vpop.f32.mrb[0].mxu0
    %2300 = vmatprep.mubr.f32.mxu0 0.0
    %2301 = vmatmul.mubr.f32.gmra.mrb[0].mxu0 %v2207
    %v2302 = vpop.f32.mrb[0].mxu0
    %v2303 = vadd.f32 %v2196, %v2302
    %v2304 = vpop.f32.mrb[0].mxu0
    %2305 = vmatprep.mubr.f32.mxu0 0.0
    %2306 = vmatmul.mubr.f32.gmra.mrb[0].mxu0 %v2210
    %v2307 = vpop.f32.mrb[0].mxu0
    %v2308 = vadd.f32 %v2196, %v2307
    %v2309 = vpop.f32.mrb[0].mxu0
    %2310 = vmatprep.mubr.f32.mxu0 0.0
    %2311 = vmatmul.mubr.f32.gmra.mrb[0].mxu0 %v2213
    %v2312 = vpop.f32.mrb[0].mxu0
    %v2313 = vadd.f32 %v2196, %v2312
    %v2314 = vpop.f32.mrb[0].mxu0
    %2315 = vmatprep.mubr.f32.mxu0 0.0
    %2316 = vmatmul.mubr.f32.gmra.mrb[0].mxu0 %v2216
    %v2317 = vpop.f32.mrb[0].mxu0
    %v2318 = vadd.f32 %v2196, %v2317
    %v2319 = vpop.f32.mrb[0].mxu0
    %2320 = vmatprep.mubr.f32.mxu0 0.0
    %2321 = vmatmul.mubr.f32.gmra.mrb[0].mxu0 %v2219
    %v2322 = vpop.f32.mrb[0].mxu0
    %v2323 = vadd.f32 %v2196, %v2322
    %v2324 = vpop.f32.mrb[0].mxu0
    %2325 = vdwg.mxu0
    %v2326 = vadd.f32 %v2288, %v29
    %v2327 = vadd.f32 %v2293, %v30
    %v2328 = vadd.f32 %v2298, %v31
    %v2329 = vadd.f32 %v2303, %v32
    %v2330 = vadd.f32 %v2308, %v33
    %v2331 = vadd.f32 %v2313, %v34
    %v2332 = vadd.f32 %v2318, %v35
    %v2333 = vadd.f32 %v2323, %v36
    %2334 = vst.msk [vmem:[%s7] sm:$0xff] %vm41, %v2326
    %2335 = vst.msk [vmem:[%s7 + $0x8] sm:$0xff] %vm41, %v2327
    %2336 = vst.msk [vmem:[%s7 + $0x10] sm:$0xff] %vm41, %v2328
    %2337 = vst.msk [vmem:[%s7 + $0x18] sm:$0xff] %vm41, %v2329
    %2338 = vst.msk [vmem:[%s7 + $0x20] sm:$0xff] %vm41, %v2330
    %2339 = vst.msk [vmem:[%s7 + $0x28] sm:$0xff] %vm41, %v2331
    %2340 = vst.msk [vmem:[%s7 + $0x30] sm:$0xff] %vm41, %v2332
    %2341 = vst.msk [vmem:[%s7 + $0x38] sm:$0xff] %vm41, %v2333
    // Predicated region
    $region30: #{tpu_custom_call.1} parent=1 // pred_check
      _
    $region31: #{tpu_custom_call.1} parent=1 // pred_check_branch
      %2343 = sbr.rel (0) target = $region33
    $region32: #{tpu_custom_call.1} parent=1 // pred_region
      _
    $region33: #{tpu_custom_call.1} parent=1 // pred_fallthru
      _
    // Predicated region
    $region34: #{tpu_custom_call.1} parent=1 // pred_check
      _
    $region35: #{tpu_custom_call.1} parent=1 // pred_check_branch
      %2345 = sbr.rel (0) target = $region37
    $region36: #{tpu_custom_call.1} parent=1 // pred_region
      %s2347 = ssub.s32 128, 128
      %2348 = vsyncadd [#allocation4], %s2347
      %s2350 = sshll.u32 [#allocation3], 4
      %s2351 = int_to_ptr.vmem [resolvable:$true] %s2350
      %2353 = dma.vmem_to_hbm [thread:$0]  %s2351, 128, %s8, [#allocation4]
    $region37: #{tpu_custom_call.1} parent=1 // pred_fallthru
      _
    // Predicated region
    $region38: #{tpu_custom_call.1} parent=1 // pred_check
      _
    $region39: #{tpu_custom_call.1} parent=1 // pred_check_branch
      %2355 = sbr.rel (0) target = $region41
    $region40: #{tpu_custom_call.1} parent=1 // pred_region
      _
    $region41: #{tpu_custom_call.1} parent=1 // pred_fallthru
      _
    // Predicated region
    $region42: #{tpu_custom_call.1} parent=1 // pred_check
      _
    $region43: #{tpu_custom_call.1} parent=1 // pred_check_branch
      %2357 = sbr.rel (0) target = $region45
    $region44: #{tpu_custom_call.1} parent=1 // pred_region
      %2358 = dma.done [#allocation4], 128
    $region45: #{tpu_custom_call.1} parent=1 // pred_fallthru
      _
    %2359 = vsyncpa [#allocation4], 1

</llo_original>
